<compile_context>
chip_gen: v6e
topology: v6e:2x2x1
jax: 0.10.0
libtpu: 0.0.40
codegen_flags: <defaults>
</compile_context>

<pallas_src>
import functools
import math

import jax
import jax.numpy as jnp
from jax.experimental import pallas as pl
from jax.experimental.pallas import tpu as pltpu

_LOG_2PI = math.log(2.0 * math.pi)
_EPS = 1e-6
_LANE = 128

_I0_SMALL = [1.0, 3.5156229, 3.0899424, 1.2067492, 0.2659732, 0.0360768,
             0.0045813]
_I0_LARGE = [0.39894228, 0.01328592, 0.00225319, -0.00157565, 0.00916281,
             -0.02057706, 0.02635537, -0.01647633, 0.00392377]


# ---------------------------------------------------------------------------
# math helpers (shared by kernel and pure-JAX reference)
# ---------------------------------------------------------------------------
def _eval_poly(y, coef):
    coef = list(coef)
    result = coef.pop()
    while coef:
        result = coef.pop() + y * result
    return result


def _log_modified_bessel_fn(x):
    # NOTE: both branches are evaluated (fine for forward; kappa > 0).
    # TODO(synk): guard branch inputs with a where if a backward pass is added.
    y = x / 3.75
    y = y * y
    small = jnp.log(_eval_poly(y, _I0_SMALL))
    y = 3.75 / x
    large = x - 0.5 * jnp.log(x) + jnp.log(_eval_poly(y, _I0_LARGE))
    return jnp.where(x < 3.75, small, large)


def _log_sigmoid(x):
    return jnp.where(x >= 0, -jnp.log1p(jnp.exp(-x)), x - jnp.log1p(jnp.exp(x)))


def _logsumexp_rows(x):
    # logsumexp over the sublane (row) axis, keepdims -> (1, T)
    m = jnp.max(x, axis=0, keepdims=True)
    return m + jnp.log(jnp.sum(jnp.exp(x - m), axis=0, keepdims=True))


# ---------------------------------------------------------------------------
# Pallas kernel: one (F, TILE_B) slab in -> one (8, TILE_B) slab out
# ---------------------------------------------------------------------------
def _weighted_nll_kernel(slab_ref, out_ref, *, off, C, M, weights):
    w_cat, w_loc, w_wl, w_th, w_mov, w_s, w_om = weights
    T = slab_ref.shape[1]

    def rows(name, n):
        o = off[name]
        return slab_ref[o:o + n, :]          # static sublane slice (free)

    gt_cat = rows('gt_category', 1)          # (1, T) float (small ints exact)
    gt_loc = rows('gt_location', 2)          # (2, T)
    gt_bbox = rows('gt_bbox', 3)             # (3, T)
    gt_vel = rows('gt_velocity', 2)          # (2, T)

    cat_zero = gt_cat == 0.0                 # (1, T)
    vel_zero = gt_vel[0:1, :] == 0.0         # (1, T)
    both_zero = jnp.logical_or(cat_zero, vel_zero)
    zero = jnp.zeros((1, T), jnp.float32)    # hoisted, reused

    # --- category: logsumexp(logits) - logits[gt]  (one-hot, no gather) ----
    logits = rows('category_logits', C)                          # (C, T)
    class_ids = jax.lax.broadcasted_iota(jnp.int32, (C, T), 0)
    onehot = (class_ids == gt_cat.astype(jnp.int32)).astype(jnp.float32)
    picked = jnp.sum(onehot * logits, axis=0, keepdims=True)
    loss_category = _logsumexp_rows(logits) - picked

    # --- location: Independent Normal over 2 dims ---------------------------
    mu = rows('location_mean', 2)
    logstd = rows('location_logstd', 2)
    z = (gt_loc - mu) * jnp.exp(-logstd)
    logp = -0.5 * z * z - logstd - 0.5 * _LOG_2PI
    loss_location = jnp.where(cat_zero, zero,
                              -jnp.sum(logp, axis=0, keepdims=True))

    # --- wl: Independent LogNormal over 2 dims on bbox[:2] + eps ------------
    mu = rows('wl_mu', 2)
    logstd = rows('wl_logstd', 2)
    logy = jnp.log(gt_bbox[0:2, :] + _EPS)
    z = (logy - mu) * jnp.exp(-logstd)
    logp = -logy - logstd - 0.5 * _LOG_2PI - 0.5 * z * z
    loss_wl = jnp.where(cat_zero, zero, -jnp.sum(logp, axis=0, keepdims=True))

    # --- von Mises mixture (per-row constants folded out of (M, T) math) ----
    def vonmises_nll(x, mix_name, cos_name, sin_name, kappa_name):
        mixture = rows(mix_name, M)                               # (M, T)
        cosp = rows(cos_name, M)
        sinp = rows(sin_name, M)
        kappa = rows(kappa_name, M)
        cosx = jnp.cos(x)                                         # (1, T) once
        sinx = jnp.sin(x)                                         # (1, T) once
        lse_mix = _logsumexp_rows(mixture)                        # (1, T)
        t = (kappa * (cosx * cosp + sinx * sinp)
             - _log_modified_bessel_fn(kappa) + mixture)          # (M, T)
        return -_logsumexp_rows(t) + lse_mix + _LOG_2PI           # (1, T)

    loss_theta = jnp.where(
        cat_zero, zero,
        vonmises_nll(gt_bbox[2:3, :], 'theta_mixture', 'theta_cos',
                     'theta_sin', 'theta_kappa'))

    # --- s: LogNormal over 1 dim on speed + eps ------------------------------
    mu = rows('s_mu', 1)
    logstd = rows('s_logstd', 1)
    logy = jnp.log(gt_vel[0:1, :] + _EPS)
    z = (logy - mu) * jnp.exp(-logstd)
    loss_s = -(-logy - logstd - 0.5 * _LOG_2PI - 0.5 * z * z)
    loss_s = jnp.where(both_zero, zero, loss_s)

    # --- omega: von Mises mixture on velocity[:, 1] --------------------------
    loss_omega = jnp.where(
        both_zero, zero,
        vonmises_nll(gt_vel[1:2, :], 'omega_mixture', 'omega_cos',
                     'omega_sin', 'omega_kappa'))

    # --- moving: Bernoulli(logits), target depends on speed ------------------
    mov_logit = rows('moving_logit', 1)
    logp1 = _log_sigmoid(mov_logit)
    logp0 = _log_sigmoid(-mov_logit)
    loss_moving = jnp.where(cat_zero, zero,
                            jnp.where(vel_zero, -logp0, -logp1))

    loss_all = (loss_category * w_cat + loss_location * w_loc
                + loss_wl * w_wl + loss_theta * w_th + loss_moving * w_mov
                + loss_s * w_s + loss_omega * w_om)

    # single lane-dense output slab; one writeback DMA per tile
    out_ref[0:1, :] = loss_all
    out_ref[1:2, :] = loss_category
    out_ref[2:3, :] = loss_location
    out_ref[3:4, :] = loss_wl
    out_ref[4:5, :] = loss_theta
    out_ref[5:6, :] = loss_moving
    out_ref[6:7, :] = loss_s
    out_ref[7:8, :] = loss_omega


# ---------------------------------------------------------------------------
# wrapper: pack inputs into one slab, tile batch on lanes, unpack outputs
# ---------------------------------------------------------------------------
def weighted_nll(params, gt, weights, *, tile_b=1024):
    total = sum(weights.values())
    w = {k: v / total for k, v in weights.items()}
    w_tuple = (w['category'], w['location'], w['wl'], w['theta'],
               w['moving'], w['s'], w['omega'])

    B, C = params['category_logits'].shape
    M = params['theta_mixture'].shape[1]

    # -- pack everything into one (F_total, B) lane-dense slab ---------------
    pieces = [
        ('category_logits', params['category_logits'].T),
        ('location_mean', params['location_mean'].T),
        ('location_logstd', params['location_logstd'].T),
        ('wl_mu', params['wl_mu'].T),
        ('wl_logstd', params['wl_logstd'].T),
        ('theta_mixture', params['theta_mixture'].T),
        ('theta_cos', params['theta_cos'].T),
        ('theta_sin', params['theta_sin'].T),
        ('theta_kappa', params['theta_kappa'].T),
        ('s_mu', params['s_mu'].T),
        ('s_logstd', params['s_logstd'].T),
        ('omega_mixture', params['omega_mixture'].T),
        ('omega_cos', params['omega_cos'].T),
        ('omega_sin', params['omega_sin'].T),
        ('omega_kappa', params['omega_kappa'].T),
        ('moving_logit', params['moving_logit'].T),
        ('gt_category', gt['category'].reshape(1, B).astype(jnp.float32)),
        ('gt_location', gt['location'].T),
        ('gt_bbox', gt['bbox'].T),
        ('gt_velocity', gt['velocity'].T),
    ]
    off = {}
    mats = []
    r = 0
    for name, mat in pieces:
        mat = mat.astype(jnp.float32)
        off[name] = r
        r += mat.shape[0]
        mats.append(mat)
    f_total = r
    f_pad = ((f_total + 7) // 8) * 8

    # batch tile: multiple of 128 lanes; single tile for small B
    tb = min(int(tile_b), max(_LANE, ((B + _LANE - 1) // _LANE) * _LANE))
    tb = ((tb + _LANE - 1) // _LANE) * _LANE
    b_pad = ((B + tb - 1) // tb) * tb
    n_tiles = b_pad // tb

    slab = jnp.concatenate(mats, axis=0)                       # (f_total, B)
    slab = jnp.pad(slab, ((0, f_pad - f_total), (0, b_pad - B)))

    kernel = functools.partial(_weighted_nll_kernel, off=off, C=C, M=M,
                               weights=w_tuple)

    out = pl.pallas_call(
        kernel,
        out_shape=jax.ShapeDtypeStruct((8, b_pad), jnp.float32),
        grid_spec=pltpu.PrefetchScalarGridSpec(
            num_scalar_prefetch=0,
            grid=(n_tiles,),
            in_specs=[pl.BlockSpec((f_pad, tb), lambda i: (0, i))],
            out_specs=pl.BlockSpec((8, tb), lambda i: (0, i)),
        ),
        compiler_params=pltpu.CompilerParams(
            dimension_semantics=("parallel",),
            vmem_limit_bytes=32 * 1024 * 1024),
    )(slab)

    out = out[:, :B]
    names = ['all', 'category', 'location', 'wl', 'theta', 'moving', 's',
             'omega']
    return {name: out[i] for i, name in enumerate(names)}


# ---------------------------------------------------------------------------
# pure-JAX reference (batch-major layout) for a sanity check
# ---------------------------------------------------------------------------
def _logsumexp_lastdim(x):
    m = jnp.max(x, axis=-1, keepdims=True)
    return m + jnp.log(jnp.sum(jnp.exp(x - m), axis=-1, keepdims=True))


def _normal_nll(x, mu, logstd):
    z = (x - mu) * jnp.exp(-logstd)
    logp = -0.5 * z * z - logstd - 0.5 * _LOG_2PI
    return -jnp.sum(logp, axis=-1, keepdims=True)


def _lognormal_nll(y, mu, logstd):
    logy = jnp.log(y)
    z = (logy - mu) * jnp.exp(-logstd)
    logp = -logy - logstd - 0.5 * _LOG_2PI - 0.5 * z * z
    return -jnp.sum(logp, axis=-1, keepdims=True)


def _vonmises_mixture_nll(x, mixture, cosp, sinp, kappa):
    log_prob = (kappa * (jnp.cos(x) * cosp + jnp.sin(x) * sinp)
                - _log_modified_bessel_fn(kappa) - _LOG_2PI)
    logits = mixture - _logsumexp_lastdim(mixture)
    return -_logsumexp_lastdim(log_prob + logits)


def weighted_nll_reference(params, gt, weights):
    total = sum(weights.values())
    w = {k: v / total for k, v in weights.items()}
    B = gt['category'].shape[0]
    gt_cat = gt['category'].reshape(B, 1).astype(jnp.int32)
    gt_vel = gt['velocity']
    cat_zero = gt_cat == 0
    vel_zero = gt_vel[:, 0:1] == 0.0
    zero = jnp.zeros((B, 1), jnp.float32)

    logits = params['category_logits']
    C = logits.shape[1]
    onehot = (jnp.arange(C, dtype=jnp.int32)[None, :] == gt_cat).astype(jnp.float32)
    picked = jnp.sum(onehot * logits, axis=-1, keepdims=True)
    loss_category = _logsumexp_lastdim(logits) - picked

    loss_location = jnp.where(
        cat_zero, zero,
        _normal_nll(gt['location'], params['location_mean'],
                    params['location_logstd']))
    loss_wl = jnp.where(
        cat_zero, zero,
        _lognormal_nll(gt['bbox'][:, 0:2] + _EPS, params['wl_mu'],
                       params['wl_logstd']))
    loss_theta = jnp.where(
        cat_zero, zero,
        _vonmises_mixture_nll(gt['bbox'][:, 2:3], params['theta_mixture'],
                              params['theta_cos'], params['theta_sin'],
                              params['theta_kappa']))
    loss_s = _lognormal_nll(gt_vel[:, 0:1] + _EPS, params['s_mu'],
                            params['s_logstd'])
    loss_s = jnp.where(cat_zero, zero, jnp.where(vel_zero, zero, loss_s))
    loss_omega = _vonmises_mixture_nll(gt_vel[:, 1:2],
                                       params['omega_mixture'],
                                       params['omega_cos'],
                                       params['omega_sin'],
                                       params['omega_kappa'])
    loss_omega = jnp.where(cat_zero, zero, jnp.where(vel_zero, zero, loss_omega))
    mov_logit = params['moving_logit']
    loss_moving = jnp.where(vel_zero, -_log_sigmoid(-mov_logit),
                            -_log_sigmoid(mov_logit))
    loss_moving = jnp.where(cat_zero, zero, loss_moving)

    loss_all = (loss_category * w['category'] + loss_location * w['location']
                + loss_wl * w['wl'] + loss_theta * w['theta']
                + loss_moving * w['moving'] + loss_s * w['s']
                + loss_omega * w['omega'])
    comps = {'all': loss_all, 'category': loss_category,
             'location': loss_location, 'wl': loss_wl, 'theta': loss_theta,
             'moving': loss_moving, 's': loss_s, 'omega': loss_omega}
    return {k: v.reshape(B) for k, v in comps.items()}


# ---------------------------------------------------------------------------
# main
# ---------------------------------------------------------------------------
def _make_inputs(key, B, C, M):
    ks = jax.random.split(key, 24)

    def randn(k, shape, scale=1.0):
        return scale * jax.random.normal(k, shape, dtype=jnp.float32)

    theta_mu = jax.random.uniform(ks[10], (B, M), jnp.float32, -math.pi, math.pi)
    omega_mu = jax.random.uniform(ks[11], (B, M), jnp.float32, -math.pi, math.pi)

    params = {
        'category_logits': randn(ks[0], (B, C)),
        'location_mean': randn(ks[1], (B, 2)),
        'location_logstd': randn(ks[2], (B, 2), 0.3),
        'wl_mu': randn(ks[3], (B, 2), 0.5),
        'wl_logstd': randn(ks[4], (B, 2), 0.3),
        'theta_mixture': randn(ks[5], (B, M)),
        'theta_cos': jnp.cos(theta_mu),
        'theta_sin': jnp.sin(theta_mu),
        'theta_kappa': jax.nn.softplus(randn(ks[6], (B, M))) + 0.5,
        's_mu': randn(ks[7], (B, 1), 0.5),
        's_logstd': randn(ks[8], (B, 1), 0.3),
        'omega_mixture': randn(ks[9], (B, M)),
        'omega_cos': jnp.cos(omega_mu),
        'omega_sin': jnp.sin(omega_mu),
        'omega_kappa': jax.nn.softplus(randn(ks[12], (B, M))) + 0.5,
        'moving_logit': randn(ks[13], (B, 1)),
    }

    speed = jnp.exp(randn(ks[17], (B, 1), 0.5))
    speed = speed * (jax.random.uniform(ks[18], (B, 1)) > 0.3)  # some zeros
    gt = {
        'category': jax.random.randint(ks[14], (B,), 0, C, dtype=jnp.int32),
        'location': randn(ks[15], (B, 2), 2.0),
        'bbox': jnp.concatenate(
            [jnp.exp(randn(ks[16], (B, 2), 0.4)),
             jax.random.uniform(ks[19], (B, 1), jnp.float32, -math.pi, math.pi)],
            axis=1),
        'velocity': jnp.concatenate(
            [speed,
             jax.random.uniform(ks[20], (B, 1), jnp.float32, -math.pi, math.pi)],
            axis=1),
    }
    return params, gt


if __name__ == "__main__":
    C, M = 4, 4
    weights = {'category': 1.0, 'location': 2.0, 'wl': 1.0, 'theta': 1.0,
               'moving': 0.5, 's': 1.0, 'omega': 1.0}

    key = jax.random.PRNGKey(0)
    k1, k2 = jax.random.split(key)

    # small case (single 128-lane tile) and a multi-tile case (grid > 1)
    for (kk, B, tile_b) in [(k1, 8, 1024), (k2, 300, 128)]:
        params, gt = _make_inputs(kk, B, C, M)
        out = weighted_nll(params, gt, weights, tile_b=tile_b)
        jax.block_until_ready(out)
        ref = weighted_nll_reference(params, gt, weights)
        for name in out:
            assert jnp.allclose(out[name], ref[name], rtol=5e-4, atol=5e-4), \
                f"mismatch in component {name} (B={B})"

    print("KERNEL_OK")
</pallas_src>

<mosaic_0001>
module attributes {stable_mosaic.version = 11 : i64} {
  func.func @_weighted_nll_kernel(%arg0: i32, %arg1: memref<56x128xf32, #tpu.memory_space<vmem>>, %arg2: memref<8x128xf32, #tpu.memory_space<vmem>>) attributes {dimension_semantics = [#tpu.dimension_semantics<parallel>], iteration_bounds = array<i64: 1>, scalar_prefetch = 0 : i64, scratch_operands = 0 : i64, tpu.core_type = #tpu.core_type<tc>, window_params = [{transform_indices = @transform_0, window_bounds = array<i64: 56, 128>}, {transform_indices = @transform_1, window_bounds = array<i64: 8, 128>}]} {
    %c47 = arith.constant 47 : index
    %c0 = arith.constant 0 : index
    %0 = vector.load %arg1[%c47, %c0] : memref<56x128xf32, #tpu.memory_space<vmem>>, vector<1x128xf32>
    %c48 = arith.constant 48 : index
    %c0_0 = arith.constant 0 : index
    %1 = vector.load %arg1[%c48, %c0_0] : memref<56x128xf32, #tpu.memory_space<vmem>>, vector<2x128xf32>
    %c50 = arith.constant 50 : index
    %c0_1 = arith.constant 0 : index
    %2 = vector.load %arg1[%c50, %c0_1] : memref<56x128xf32, #tpu.memory_space<vmem>>, vector<3x128xf32>
    %c53 = arith.constant 53 : index
    %c0_2 = arith.constant 0 : index
    %3 = vector.load %arg1[%c53, %c0_2] : memref<56x128xf32, #tpu.memory_space<vmem>>, vector<2x128xf32>
    %cst = arith.constant 0.000000e+00 : f32
    %4 = vector.broadcast %cst : f32 to vector<1x128xf32>
    %5 = arith.cmpf oeq, %0, %4 : vector<1x128xf32>
    %6 = vector.extract_strided_slice %3 {offsets = [0, 0], sizes = [1, 128], strides = [1, 1]} : vector<2x128xf32> to vector<1x128xf32>
    %cst_3 = arith.constant 0.000000e+00 : f32
    %7 = vector.broadcast %cst_3 : f32 to vector<1x128xf32>
    %8 = arith.cmpf oeq, %6, %7 : vector<1x128xf32>
    %9 = arith.ori %5, %8 : vector<1x128xi1>
    %cst_4 = arith.constant 0.000000e+00 : f32
    %10 = vector.broadcast %cst_4 : f32 to vector<1x128xf32>
    %c0_5 = arith.constant 0 : index
    %c0_6 = arith.constant 0 : index
    %11 = vector.load %arg1[%c0_5, %c0_6] : memref<56x128xf32, #tpu.memory_space<vmem>>, vector<4x128xf32>
    %12 = tpu.iota {dimensions = array<i32: 0>} : vector<4x128xi32>
    %13 = arith.fptosi %0 : vector<1x128xf32> to vector<1x128xi32>
    %14 = vector.broadcast %13 : vector<1x128xi32> to vector<4x128xi32>
    %15 = arith.cmpi eq, %12, %14 : vector<4x128xi32>
    %16 = arith.extui %15 : vector<4x128xi1> to vector<4x128xi32>
    %17 = arith.sitofp %16 : vector<4x128xi32> to vector<4x128xf32>
    %18 = arith.mulf %17, %11 : vector<4x128xf32>
    %cst_7 = arith.constant dense<0.000000e+00> : vector<128xf32>
    %19 = vector.multi_reduction <add>, %18, %cst_7 [0] : vector<4x128xf32> to vector<128xf32>
    %20 = vector.shape_cast %19 : vector<128xf32> to vector<1x128xf32>
    %cst_8 = arith.constant dense<0xFF800000> : vector<128xf32>
    %21 = vector.multi_reduction <maximumf>, %11, %cst_8 [0] : vector<4x128xf32> to vector<128xf32>
    %22 = vector.shape_cast %21 : vector<128xf32> to vector<1x128xf32>
    %23 = vector.broadcast %22 : vector<1x128xf32> to vector<4x128xf32>
    %24 = arith.subf %11, %23 : vector<4x128xf32>
    %25 = math.exp %24 : vector<4x128xf32>
    %cst_9 = arith.constant dense<0.000000e+00> : vector<128xf32>
    %26 = vector.multi_reduction <add>, %25, %cst_9 [0] : vector<4x128xf32> to vector<128xf32>
    %27 = vector.shape_cast %26 : vector<128xf32> to vector<1x128xf32>
    %28 = math.log %27 : vector<1x128xf32>
    %29 = arith.addf %22, %28 : vector<1x128xf32>
    %30 = arith.subf %29, %20 : vector<1x128xf32>
    %c4 = arith.constant 4 : index
    %c0_10 = arith.constant 0 : index
    %31 = vector.load %arg1[%c4, %c0_10] : memref<56x128xf32, #tpu.memory_space<vmem>>, vector<2x128xf32>
    %c6 = arith.constant 6 : index
    %c0_11 = arith.constant 0 : index
    %32 = vector.load %arg1[%c6, %c0_11] : memref<56x128xf32, #tpu.memory_space<vmem>>, vector<2x128xf32>
    %33 = arith.subf %1, %31 : vector<2x128xf32>
    %cst_12 = arith.constant 0.000000e+00 : f32
    %34 = vector.broadcast %cst_12 : f32 to vector<2x128xf32>
    %35 = arith.subf %34, %32 : vector<2x128xf32>
    %36 = math.exp %35 : vector<2x128xf32>
    %37 = arith.mulf %33, %36 : vector<2x128xf32>
    %cst_13 = arith.constant -5.000000e-01 : f32
    %38 = vector.broadcast %cst_13 : f32 to vector<2x128xf32>
    %39 = arith.mulf %38, %37 : vector<2x128xf32>
    %40 = arith.mulf %39, %37 : vector<2x128xf32>
    %41 = arith.subf %40, %32 : vector<2x128xf32>
    %cst_14 = arith.constant 0.918938517 : f32
    %42 = vector.broadcast %cst_14 : f32 to vector<2x128xf32>
    %43 = arith.subf %41, %42 : vector<2x128xf32>
    %cst_15 = arith.constant dense<0.000000e+00> : vector<128xf32>
    %44 = vector.multi_reduction <add>, %43, %cst_15 [0] : vector<2x128xf32> to vector<128xf32>
    %45 = vector.shape_cast %44 : vector<128xf32> to vector<1x128xf32>
    %cst_16 = arith.constant 0.000000e+00 : f32
    %46 = vector.broadcast %cst_16 : f32 to vector<1x128xf32>
    %47 = arith.subf %46, %45 : vector<1x128xf32>
    %48 = arith.select %5, %10, %47 : vector<1x128xi1>, vector<1x128xf32>
    %c8 = arith.constant 8 : index
    %c0_17 = arith.constant 0 : index
    %49 = vector.load %arg1[%c8, %c0_17] : memref<56x128xf32, #tpu.memory_space<vmem>>, vector<2x128xf32>
    %c10 = arith.constant 10 : index
    %c0_18 = arith.constant 0 : index
    %50 = vector.load %arg1[%c10, %c0_18] : memref<56x128xf32, #tpu.memory_space<vmem>>, vector<2x128xf32>
    %51 = vector.extract_strided_slice %2 {offsets = [0, 0], sizes = [2, 128], strides = [1, 1]} : vector<3x128xf32> to vector<2x128xf32>
    %cst_19 = arith.constant 9.99999997E-7 : f32
    %52 = vector.broadcast %cst_19 : f32 to vector<2x128xf32>
    %53 = arith.addf %51, %52 : vector<2x128xf32>
    %54 = math.log %53 : vector<2x128xf32>
    %55 = arith.subf %54, %49 : vector<2x128xf32>
    %cst_20 = arith.constant 0.000000e+00 : f32
    %56 = vector.broadcast %cst_20 : f32 to vector<2x128xf32>
    %57 = arith.subf %56, %50 : vector<2x128xf32>
    %58 = math.exp %57 : vector<2x128xf32>
    %59 = arith.mulf %55, %58 : vector<2x128xf32>
    %cst_21 = arith.constant 0.000000e+00 : f32
    %60 = vector.broadcast %cst_21 : f32 to vector<2x128xf32>
    %61 = arith.subf %60, %54 : vector<2x128xf32>
    %62 = arith.subf %61, %50 : vector<2x128xf32>
    %cst_22 = arith.constant 0.918938517 : f32
    %63 = vector.broadcast %cst_22 : f32 to vector<2x128xf32>
    %64 = arith.subf %62, %63 : vector<2x128xf32>
    %cst_23 = arith.constant 5.000000e-01 : f32
    %65 = vector.broadcast %cst_23 : f32 to vector<2x128xf32>
    %66 = arith.mulf %65, %59 : vector<2x128xf32>
    %67 = arith.mulf %66, %59 : vector<2x128xf32>
    %68 = arith.subf %64, %67 : vector<2x128xf32>
    %cst_24 = arith.constant dense<0.000000e+00> : vector<128xf32>
    %69 = vector.multi_reduction <add>, %68, %cst_24 [0] : vector<2x128xf32> to vector<128xf32>
    %70 = vector.shape_cast %69 : vector<128xf32> to vector<1x128xf32>
    %cst_25 = arith.constant 0.000000e+00 : f32
    %71 = vector.broadcast %cst_25 : f32 to vector<1x128xf32>
    %72 = arith.subf %71, %70 : vector<1x128xf32>
    %73 = arith.select %5, %10, %72 : vector<1x128xi1>, vector<1x128xf32>
    %74 = vector.extract_strided_slice %2 {offsets = [2, 0], sizes = [1, 128], strides = [1, 1]} : vector<3x128xf32> to vector<1x128xf32>
    %c12 = arith.constant 12 : index
    %c0_26 = arith.constant 0 : index
    %75 = vector.load %arg1[%c12, %c0_26] : memref<56x128xf32, #tpu.memory_space<vmem>>, vector<4x128xf32>
    %c16 = arith.constant 16 : index
    %c0_27 = arith.constant 0 : index
    %76 = vector.load %arg1[%c16, %c0_27] : memref<56x128xf32, #tpu.memory_space<vmem>>, vector<4x128xf32>
    %c20 = arith.constant 20 : index
    %c0_28 = arith.constant 0 : index
    %77 = vector.load %arg1[%c20, %c0_28] : memref<56x128xf32, #tpu.memory_space<vmem>>, vector<4x128xf32>
    %c24 = arith.constant 24 : index
    %c0_29 = arith.constant 0 : index
    %78 = vector.load %arg1[%c24, %c0_29] : memref<56x128xf32, #tpu.memory_space<vmem>>, vector<4x128xf32>
    %79 = math.cos %74 : vector<1x128xf32>
    %80 = math.sin %74 : vector<1x128xf32>
    %cst_30 = arith.constant dense<0xFF800000> : vector<128xf32>
    %81 = vector.multi_reduction <maximumf>, %75, %cst_30 [0] : vector<4x128xf32> to vector<128xf32>
    %82 = vector.shape_cast %81 : vector<128xf32> to vector<1x128xf32>
    %83 = vector.broadcast %82 : vector<1x128xf32> to vector<4x128xf32>
    %84 = arith.subf %75, %83 : vector<4x128xf32>
    %85 = math.exp %84 : vector<4x128xf32>
    %cst_31 = arith.constant dense<0.000000e+00> : vector<128xf32>
    %86 = vector.multi_reduction <add>, %85, %cst_31 [0] : vector<4x128xf32> to vector<128xf32>
    %87 = vector.shape_cast %86 : vector<128xf32> to vector<1x128xf32>
    %88 = math.log %87 : vector<1x128xf32>
    %89 = arith.addf %82, %88 : vector<1x128xf32>
    %90 = vector.broadcast %79 : vector<1x128xf32> to vector<4x128xf32>
    %91 = arith.mulf %90, %76 : vector<4x128xf32>
    %92 = vector.broadcast %80 : vector<1x128xf32> to vector<4x128xf32>
    %93 = arith.mulf %92, %77 : vector<4x128xf32>
    %94 = arith.addf %91, %93 : vector<4x128xf32>
    %95 = arith.mulf %78, %94 : vector<4x128xf32>
    %cst_32 = arith.constant 3.750000e+00 : f32
    %96 = vector.broadcast %cst_32 : f32 to vector<4x128xf32>
    %97 = arith.divf %78, %96 : vector<4x128xf32>
    %98 = arith.mulf %97, %97 : vector<4x128xf32>
    %cst_33 = arith.constant 4.581300e-03 : f32
    %99 = vector.broadcast %cst_33 : f32 to vector<4x128xf32>
    %100 = arith.mulf %98, %99 : vector<4x128xf32>
    %cst_34 = arith.constant 3.607680e-02 : f32
    %101 = vector.broadcast %cst_34 : f32 to vector<4x128xf32>
    %102 = arith.addf %101, %100 : vector<4x128xf32>
    %103 = arith.mulf %98, %102 : vector<4x128xf32>
    %cst_35 = arith.constant 0.26597321 : f32
    %104 = vector.broadcast %cst_35 : f32 to vector<4x128xf32>
    %105 = arith.addf %104, %103 : vector<4x128xf32>
    %106 = arith.mulf %98, %105 : vector<4x128xf32>
    %cst_36 = arith.constant 1.2067492 : f32
    %107 = vector.broadcast %cst_36 : f32 to vector<4x128xf32>
    %108 = arith.addf %107, %106 : vector<4x128xf32>
    %109 = arith.mulf %98, %108 : vector<4x128xf32>
    %cst_37 = arith.constant 3.08994246 : f32
    %110 = vector.broadcast %cst_37 : f32 to vector<4x128xf32>
    %111 = arith.addf %110, %109 : vector<4x128xf32>
    %112 = arith.mulf %98, %111 : vector<4x128xf32>
    %cst_38 = arith.constant 3.51562285 : f32
    %113 = vector.broadcast %cst_38 : f32 to vector<4x128xf32>
    %114 = arith.addf %113, %112 : vector<4x128xf32>
    %115 = arith.mulf %98, %114 : vector<4x128xf32>
    %cst_39 = arith.constant 1.000000e+00 : f32
    %116 = vector.broadcast %cst_39 : f32 to vector<4x128xf32>
    %117 = arith.addf %116, %115 : vector<4x128xf32>
    %118 = math.log %117 : vector<4x128xf32>
    %cst_40 = arith.constant 3.750000e+00 : f32
    %119 = vector.broadcast %cst_40 : f32 to vector<4x128xf32>
    %120 = arith.divf %119, %78 : vector<4x128xf32>
    %121 = math.log %78 : vector<4x128xf32>
    %cst_41 = arith.constant 5.000000e-01 : f32
    %122 = vector.broadcast %cst_41 : f32 to vector<4x128xf32>
    %123 = arith.mulf %122, %121 : vector<4x128xf32>
    %124 = arith.subf %78, %123 : vector<4x128xf32>
    %cst_42 = arith.constant 3.923770e-03 : f32
    %125 = vector.broadcast %cst_42 : f32 to vector<4x128xf32>
    %126 = arith.mulf %120, %125 : vector<4x128xf32>
    %cst_43 = arith.constant -0.0164763294 : f32
    %127 = vector.broadcast %cst_43 : f32 to vector<4x128xf32>
    %128 = arith.addf %127, %126 : vector<4x128xf32>
    %129 = arith.mulf %120, %128 : vector<4x128xf32>
    %cst_44 = arith.constant 0.0263553709 : f32
    %130 = vector.broadcast %cst_44 : f32 to vector<4x128xf32>
    %131 = arith.addf %130, %129 : vector<4x128xf32>
    %132 = arith.mulf %120, %131 : vector<4x128xf32>
    %cst_45 = arith.constant -0.0205770601 : f32
    %133 = vector.broadcast %cst_45 : f32 to vector<4x128xf32>
    %134 = arith.addf %133, %132 : vector<4x128xf32>
    %135 = arith.mulf %120, %134 : vector<4x128xf32>
    %cst_46 = arith.constant 0.00916280969 : f32
    %136 = vector.broadcast %cst_46 : f32 to vector<4x128xf32>
    %137 = arith.addf %136, %135 : vector<4x128xf32>
    %138 = arith.mulf %120, %137 : vector<4x128xf32>
    %cst_47 = arith.constant -1.575650e-03 : f32
    %139 = vector.broadcast %cst_47 : f32 to vector<4x128xf32>
    %140 = arith.addf %139, %138 : vector<4x128xf32>
    %141 = arith.mulf %120, %140 : vector<4x128xf32>
    %cst_48 = arith.constant 2.253190e-03 : f32
    %142 = vector.broadcast %cst_48 : f32 to vector<4x128xf32>
    %143 = arith.addf %142, %141 : vector<4x128xf32>
    %144 = arith.mulf %120, %143 : vector<4x128xf32>
    %cst_49 = arith.constant 0.01328592 : f32
    %145 = vector.broadcast %cst_49 : f32 to vector<4x128xf32>
    %146 = arith.addf %145, %144 : vector<4x128xf32>
    %147 = arith.mulf %120, %146 : vector<4x128xf32>
    %cst_50 = arith.constant 0.398942292 : f32
    %148 = vector.broadcast %cst_50 : f32 to vector<4x128xf32>
    %149 = arith.addf %148, %147 : vector<4x128xf32>
    %150 = math.log %149 : vector<4x128xf32>
    %151 = arith.addf %124, %150 : vector<4x128xf32>
    %cst_51 = arith.constant 3.750000e+00 : f32
    %152 = vector.broadcast %cst_51 : f32 to vector<4x128xf32>
    %153 = arith.cmpf olt, %78, %152 : vector<4x128xf32>
    %154 = arith.select %153, %118, %151 : vector<4x128xi1>, vector<4x128xf32>
    %155 = arith.subf %95, %154 : vector<4x128xf32>
    %156 = arith.addf %155, %75 : vector<4x128xf32>
    %cst_52 = arith.constant dense<0xFF800000> : vector<128xf32>
    %157 = vector.multi_reduction <maximumf>, %156, %cst_52 [0] : vector<4x128xf32> to vector<128xf32>
    %158 = vector.shape_cast %157 : vector<128xf32> to vector<1x128xf32>
    %159 = vector.broadcast %158 : vector<1x128xf32> to vector<4x128xf32>
    %160 = arith.subf %156, %159 : vector<4x128xf32>
    %161 = math.exp %160 : vector<4x128xf32>
    %cst_53 = arith.constant dense<0.000000e+00> : vector<128xf32>
    %162 = vector.multi_reduction <add>, %161, %cst_53 [0] : vector<4x128xf32> to vector<128xf32>
    %163 = vector.shape_cast %162 : vector<128xf32> to vector<1x128xf32>
    %164 = math.log %163 : vector<1x128xf32>
    %165 = arith.addf %158, %164 : vector<1x128xf32>
    %cst_54 = arith.constant 0.000000e+00 : f32
    %166 = vector.broadcast %cst_54 : f32 to vector<1x128xf32>
    %167 = arith.subf %166, %165 : vector<1x128xf32>
    %168 = arith.addf %167, %89 : vector<1x128xf32>
    %cst_55 = arith.constant 1.83787704 : f32
    %169 = vector.broadcast %cst_55 : f32 to vector<1x128xf32>
    %170 = arith.addf %168, %169 : vector<1x128xf32>
    %171 = arith.select %5, %10, %170 : vector<1x128xi1>, vector<1x128xf32>
    %c28 = arith.constant 28 : index
    %c0_56 = arith.constant 0 : index
    %172 = vector.load %arg1[%c28, %c0_56] : memref<56x128xf32, #tpu.memory_space<vmem>>, vector<1x128xf32>
    %c29 = arith.constant 29 : index
    %c0_57 = arith.constant 0 : index
    %173 = vector.load %arg1[%c29, %c0_57] : memref<56x128xf32, #tpu.memory_space<vmem>>, vector<1x128xf32>
    %174 = vector.extract_strided_slice %3 {offsets = [0, 0], sizes = [1, 128], strides = [1, 1]} : vector<2x128xf32> to vector<1x128xf32>
    %cst_58 = arith.constant 9.99999997E-7 : f32
    %175 = vector.broadcast %cst_58 : f32 to vector<1x128xf32>
    %176 = arith.addf %174, %175 : vector<1x128xf32>
    %177 = math.log %176 : vector<1x128xf32>
    %178 = arith.subf %177, %172 : vector<1x128xf32>
    %cst_59 = arith.constant 0.000000e+00 : f32
    %179 = vector.broadcast %cst_59 : f32 to vector<1x128xf32>
    %180 = arith.subf %179, %173 : vector<1x128xf32>
    %181 = math.exp %180 : vector<1x128xf32>
    %182 = arith.mulf %178, %181 : vector<1x128xf32>
    %cst_60 = arith.constant 0.000000e+00 : f32
    %183 = vector.broadcast %cst_60 : f32 to vector<1x128xf32>
    %184 = arith.subf %183, %177 : vector<1x128xf32>
    %185 = arith.subf %184, %173 : vector<1x128xf32>
    %cst_61 = arith.constant 0.918938517 : f32
    %186 = vector.broadcast %cst_61 : f32 to vector<1x128xf32>
    %187 = arith.subf %185, %186 : vector<1x128xf32>
    %cst_62 = arith.constant 5.000000e-01 : f32
    %188 = vector.broadcast %cst_62 : f32 to vector<1x128xf32>
    %189 = arith.mulf %188, %182 : vector<1x128xf32>
    %190 = arith.mulf %189, %182 : vector<1x128xf32>
    %191 = arith.subf %187, %190 : vector<1x128xf32>
    %cst_63 = arith.constant 0.000000e+00 : f32
    %192 = vector.broadcast %cst_63 : f32 to vector<1x128xf32>
    %193 = arith.subf %192, %191 : vector<1x128xf32>
    %194 = arith.select %9, %10, %193 : vector<1x128xi1>, vector<1x128xf32>
    %195 = vector.extract_strided_slice %3 {offsets = [1, 0], sizes = [1, 128], strides = [1, 1]} : vector<2x128xf32> to vector<1x128xf32>
    %c30 = arith.constant 30 : index
    %c0_64 = arith.constant 0 : index
    %196 = vector.load %arg1[%c30, %c0_64] : memref<56x128xf32, #tpu.memory_space<vmem>>, vector<4x128xf32>
    %c34 = arith.constant 34 : index
    %c0_65 = arith.constant 0 : index
    %197 = vector.load %arg1[%c34, %c0_65] : memref<56x128xf32, #tpu.memory_space<vmem>>, vector<4x128xf32>
    %c38 = arith.constant 38 : index
    %c0_66 = arith.constant 0 : index
    %198 = vector.load %arg1[%c38, %c0_66] : memref<56x128xf32, #tpu.memory_space<vmem>>, vector<4x128xf32>
    %c42 = arith.constant 42 : index
    %c0_67 = arith.constant 0 : index
    %199 = vector.load %arg1[%c42, %c0_67] : memref<56x128xf32, #tpu.memory_space<vmem>>, vector<4x128xf32>
    %200 = math.cos %195 : vector<1x128xf32>
    %201 = math.sin %195 : vector<1x128xf32>
    %cst_68 = arith.constant dense<0xFF800000> : vector<128xf32>
    %202 = vector.multi_reduction <maximumf>, %196, %cst_68 [0] : vector<4x128xf32> to vector<128xf32>
    %203 = vector.shape_cast %202 : vector<128xf32> to vector<1x128xf32>
    %204 = vector.broadcast %203 : vector<1x128xf32> to vector<4x128xf32>
    %205 = arith.subf %196, %204 : vector<4x128xf32>
    %206 = math.exp %205 : vector<4x128xf32>
    %cst_69 = arith.constant dense<0.000000e+00> : vector<128xf32>
    %207 = vector.multi_reduction <add>, %206, %cst_69 [0] : vector<4x128xf32> to vector<128xf32>
    %208 = vector.shape_cast %207 : vector<128xf32> to vector<1x128xf32>
    %209 = math.log %208 : vector<1x128xf32>
    %210 = arith.addf %203, %209 : vector<1x128xf32>
    %211 = vector.broadcast %200 : vector<1x128xf32> to vector<4x128xf32>
    %212 = arith.mulf %211, %197 : vector<4x128xf32>
    %213 = vector.broadcast %201 : vector<1x128xf32> to vector<4x128xf32>
    %214 = arith.mulf %213, %198 : vector<4x128xf32>
    %215 = arith.addf %212, %214 : vector<4x128xf32>
    %216 = arith.mulf %199, %215 : vector<4x128xf32>
    %cst_70 = arith.constant 3.750000e+00 : f32
    %217 = vector.broadcast %cst_70 : f32 to vector<4x128xf32>
    %218 = arith.divf %199, %217 : vector<4x128xf32>
    %219 = arith.mulf %218, %218 : vector<4x128xf32>
    %cst_71 = arith.constant 4.581300e-03 : f32
    %220 = vector.broadcast %cst_71 : f32 to vector<4x128xf32>
    %221 = arith.mulf %219, %220 : vector<4x128xf32>
    %cst_72 = arith.constant 3.607680e-02 : f32
    %222 = vector.broadcast %cst_72 : f32 to vector<4x128xf32>
    %223 = arith.addf %222, %221 : vector<4x128xf32>
    %224 = arith.mulf %219, %223 : vector<4x128xf32>
    %cst_73 = arith.constant 0.26597321 : f32
    %225 = vector.broadcast %cst_73 : f32 to vector<4x128xf32>
    %226 = arith.addf %225, %224 : vector<4x128xf32>
    %227 = arith.mulf %219, %226 : vector<4x128xf32>
    %cst_74 = arith.constant 1.2067492 : f32
    %228 = vector.broadcast %cst_74 : f32 to vector<4x128xf32>
    %229 = arith.addf %228, %227 : vector<4x128xf32>
    %230 = arith.mulf %219, %229 : vector<4x128xf32>
    %cst_75 = arith.constant 3.08994246 : f32
    %231 = vector.broadcast %cst_75 : f32 to vector<4x128xf32>
    %232 = arith.addf %231, %230 : vector<4x128xf32>
    %233 = arith.mulf %219, %232 : vector<4x128xf32>
    %cst_76 = arith.constant 3.51562285 : f32
    %234 = vector.broadcast %cst_76 : f32 to vector<4x128xf32>
    %235 = arith.addf %234, %233 : vector<4x128xf32>
    %236 = arith.mulf %219, %235 : vector<4x128xf32>
    %cst_77 = arith.constant 1.000000e+00 : f32
    %237 = vector.broadcast %cst_77 : f32 to vector<4x128xf32>
    %238 = arith.addf %237, %236 : vector<4x128xf32>
    %239 = math.log %238 : vector<4x128xf32>
    %cst_78 = arith.constant 3.750000e+00 : f32
    %240 = vector.broadcast %cst_78 : f32 to vector<4x128xf32>
    %241 = arith.divf %240, %199 : vector<4x128xf32>
    %242 = math.log %199 : vector<4x128xf32>
    %cst_79 = arith.constant 5.000000e-01 : f32
    %243 = vector.broadcast %cst_79 : f32 to vector<4x128xf32>
    %244 = arith.mulf %243, %242 : vector<4x128xf32>
    %245 = arith.subf %199, %244 : vector<4x128xf32>
    %cst_80 = arith.constant 3.923770e-03 : f32
    %246 = vector.broadcast %cst_80 : f32 to vector<4x128xf32>
    %247 = arith.mulf %241, %246 : vector<4x128xf32>
    %cst_81 = arith.constant -0.0164763294 : f32
    %248 = vector.broadcast %cst_81 : f32 to vector<4x128xf32>
    %249 = arith.addf %248, %247 : vector<4x128xf32>
    %250 = arith.mulf %241, %249 : vector<4x128xf32>
    %cst_82 = arith.constant 0.0263553709 : f32
    %251 = vector.broadcast %cst_82 : f32 to vector<4x128xf32>
    %252 = arith.addf %251, %250 : vector<4x128xf32>
    %253 = arith.mulf %241, %252 : vector<4x128xf32>
    %cst_83 = arith.constant -0.0205770601 : f32
    %254 = vector.broadcast %cst_83 : f32 to vector<4x128xf32>
    %255 = arith.addf %254, %253 : vector<4x128xf32>
    %256 = arith.mulf %241, %255 : vector<4x128xf32>
    %cst_84 = arith.constant 0.00916280969 : f32
    %257 = vector.broadcast %cst_84 : f32 to vector<4x128xf32>
    %258 = arith.addf %257, %256 : vector<4x128xf32>
    %259 = arith.mulf %241, %258 : vector<4x128xf32>
    %cst_85 = arith.constant -1.575650e-03 : f32
    %260 = vector.broadcast %cst_85 : f32 to vector<4x128xf32>
    %261 = arith.addf %260, %259 : vector<4x128xf32>
    %262 = arith.mulf %241, %261 : vector<4x128xf32>
    %cst_86 = arith.constant 2.253190e-03 : f32
    %263 = vector.broadcast %cst_86 : f32 to vector<4x128xf32>
    %264 = arith.addf %263, %262 : vector<4x128xf32>
    %265 = arith.mulf %241, %264 : vector<4x128xf32>
    %cst_87 = arith.constant 0.01328592 : f32
    %266 = vector.broadcast %cst_87 : f32 to vector<4x128xf32>
    %267 = arith.addf %266, %265 : vector<4x128xf32>
    %268 = arith.mulf %241, %267 : vector<4x128xf32>
    %cst_88 = arith.constant 0.398942292 : f32
    %269 = vector.broadcast %cst_88 : f32 to vector<4x128xf32>
    %270 = arith.addf %269, %268 : vector<4x128xf32>
    %271 = math.log %270 : vector<4x128xf32>
    %272 = arith.addf %245, %271 : vector<4x128xf32>
    %cst_89 = arith.constant 3.750000e+00 : f32
    %273 = vector.broadcast %cst_89 : f32 to vector<4x128xf32>
    %274 = arith.cmpf olt, %199, %273 : vector<4x128xf32>
    %275 = arith.select %274, %239, %272 : vector<4x128xi1>, vector<4x128xf32>
    %276 = arith.subf %216, %275 : vector<4x128xf32>
    %277 = arith.addf %276, %196 : vector<4x128xf32>
    %cst_90 = arith.constant dense<0xFF800000> : vector<128xf32>
    %278 = vector.multi_reduction <maximumf>, %277, %cst_90 [0] : vector<4x128xf32> to vector<128xf32>
    %279 = vector.shape_cast %278 : vector<128xf32> to vector<1x128xf32>
    %280 = vector.broadcast %279 : vector<1x128xf32> to vector<4x128xf32>
    %281 = arith.subf %277, %280 : vector<4x128xf32>
    %282 = math.exp %281 : vector<4x128xf32>
    %cst_91 = arith.constant dense<0.000000e+00> : vector<128xf32>
    %283 = vector.multi_reduction <add>, %282, %cst_91 [0] : vector<4x128xf32> to vector<128xf32>
    %284 = vector.shape_cast %283 : vector<128xf32> to vector<1x128xf32>
    %285 = math.log %284 : vector<1x128xf32>
    %286 = arith.addf %279, %285 : vector<1x128xf32>
    %cst_92 = arith.constant 0.000000e+00 : f32
    %287 = vector.broadcast %cst_92 : f32 to vector<1x128xf32>
    %288 = arith.subf %287, %286 : vector<1x128xf32>
    %289 = arith.addf %288, %210 : vector<1x128xf32>
    %cst_93 = arith.constant 1.83787704 : f32
    %290 = vector.broadcast %cst_93 : f32 to vector<1x128xf32>
    %291 = arith.addf %289, %290 : vector<1x128xf32>
    %292 = arith.select %9, %10, %291 : vector<1x128xi1>, vector<1x128xf32>
    %c46 = arith.constant 46 : index
    %c0_94 = arith.constant 0 : index
    %293 = vector.load %arg1[%c46, %c0_94] : memref<56x128xf32, #tpu.memory_space<vmem>>, vector<1x128xf32>
    %cst_95 = arith.constant 0.000000e+00 : f32
    %294 = vector.broadcast %cst_95 : f32 to vector<1x128xf32>
    %295 = arith.cmpf oge, %293, %294 : vector<1x128xf32>
    %cst_96 = arith.constant 0.000000e+00 : f32
    %296 = vector.broadcast %cst_96 : f32 to vector<1x128xf32>
    %297 = arith.subf %296, %293 : vector<1x128xf32>
    %298 = math.exp %297 : vector<1x128xf32>
    %299 = math.log1p %298 : vector<1x128xf32>
    %cst_97 = arith.constant 0.000000e+00 : f32
    %300 = vector.broadcast %cst_97 : f32 to vector<1x128xf32>
    %301 = arith.subf %300, %299 : vector<1x128xf32>
    %302 = math.exp %293 : vector<1x128xf32>
    %303 = math.log1p %302 : vector<1x128xf32>
    %304 = arith.subf %293, %303 : vector<1x128xf32>
    %305 = arith.select %295, %301, %304 : vector<1x128xi1>, vector<1x128xf32>
    %cst_98 = arith.constant 0.000000e+00 : f32
    %306 = vector.broadcast %cst_98 : f32 to vector<1x128xf32>
    %307 = arith.subf %306, %293 : vector<1x128xf32>
    %cst_99 = arith.constant 0.000000e+00 : f32
    %308 = vector.broadcast %cst_99 : f32 to vector<1x128xf32>
    %309 = arith.cmpf oge, %307, %308 : vector<1x128xf32>
    %cst_100 = arith.constant 0.000000e+00 : f32
    %310 = vector.broadcast %cst_100 : f32 to vector<1x128xf32>
    %311 = arith.subf %310, %307 : vector<1x128xf32>
    %312 = math.exp %311 : vector<1x128xf32>
    %313 = math.log1p %312 : vector<1x128xf32>
    %cst_101 = arith.constant 0.000000e+00 : f32
    %314 = vector.broadcast %cst_101 : f32 to vector<1x128xf32>
    %315 = arith.subf %314, %313 : vector<1x128xf32>
    %316 = math.exp %307 : vector<1x128xf32>
    %317 = math.log1p %316 : vector<1x128xf32>
    %318 = arith.subf %307, %317 : vector<1x128xf32>
    %319 = arith.select %309, %315, %318 : vector<1x128xi1>, vector<1x128xf32>
    %cst_102 = arith.constant 0.000000e+00 : f32
    %320 = vector.broadcast %cst_102 : f32 to vector<1x128xf32>
    %321 = arith.subf %320, %319 : vector<1x128xf32>
    %cst_103 = arith.constant 0.000000e+00 : f32
    %322 = vector.broadcast %cst_103 : f32 to vector<1x128xf32>
    %323 = arith.subf %322, %305 : vector<1x128xf32>
    %324 = arith.select %8, %321, %323 : vector<1x128xi1>, vector<1x128xf32>
    %325 = arith.select %5, %10, %324 : vector<1x128xi1>, vector<1x128xf32>
    %cst_104 = arith.constant 0.13333334 : f32
    %326 = vector.broadcast %cst_104 : f32 to vector<1x128xf32>
    %327 = arith.mulf %30, %326 : vector<1x128xf32>
    %cst_105 = arith.constant 0.266666681 : f32
    %328 = vector.broadcast %cst_105 : f32 to vector<1x128xf32>
    %329 = arith.mulf %48, %328 : vector<1x128xf32>
    %330 = arith.addf %327, %329 : vector<1x128xf32>
    %cst_106 = arith.constant 0.13333334 : f32
    %331 = vector.broadcast %cst_106 : f32 to vector<1x128xf32>
    %332 = arith.mulf %73, %331 : vector<1x128xf32>
    %333 = arith.addf %330, %332 : vector<1x128xf32>
    %cst_107 = arith.constant 0.13333334 : f32
    %334 = vector.broadcast %cst_107 : f32 to vector<1x128xf32>
    %335 = arith.mulf %171, %334 : vector<1x128xf32>
    %336 = arith.addf %333, %335 : vector<1x128xf32>
    %cst_108 = arith.constant 0.0666666701 : f32
    %337 = vector.broadcast %cst_108 : f32 to vector<1x128xf32>
    %338 = arith.mulf %325, %337 : vector<1x128xf32>
    %339 = arith.addf %336, %338 : vector<1x128xf32>
    %cst_109 = arith.constant 0.13333334 : f32
    %340 = vector.broadcast %cst_109 : f32 to vector<1x128xf32>
    %341 = arith.mulf %194, %340 : vector<1x128xf32>
    %342 = arith.addf %339, %341 : vector<1x128xf32>
    %cst_110 = arith.constant 0.13333334 : f32
    %343 = vector.broadcast %cst_110 : f32 to vector<1x128xf32>
    %344 = arith.mulf %292, %343 : vector<1x128xf32>
    %345 = arith.addf %342, %344 : vector<1x128xf32>
    %c0_111 = arith.constant 0 : index
    %c0_112 = arith.constant 0 : index
    %346 = vector.load %arg2[%c0_111, %c0_112] : memref<8x128xf32, #tpu.memory_space<vmem>>, vector<1x128xf32>
    tpu.vector_store %arg2[%c0_111, %c0_112], %345 {strides = array<i32>} : memref<8x128xf32, #tpu.memory_space<vmem>>, vector<1x128xf32>,
    %c1 = arith.constant 1 : index
    %c0_113 = arith.constant 0 : index
    %347 = vector.load %arg2[%c1, %c0_113] : memref<8x128xf32, #tpu.memory_space<vmem>>, vector<1x128xf32>
    tpu.vector_store %arg2[%c1, %c0_113], %30 {strides = array<i32>} : memref<8x128xf32, #tpu.memory_space<vmem>>, vector<1x128xf32>,
    %c2 = arith.constant 2 : index
    %c0_114 = arith.constant 0 : index
    %348 = vector.load %arg2[%c2, %c0_114] : memref<8x128xf32, #tpu.memory_space<vmem>>, vector<1x128xf32>
    tpu.vector_store %arg2[%c2, %c0_114], %48 {strides = array<i32>} : memref<8x128xf32, #tpu.memory_space<vmem>>, vector<1x128xf32>,
    %c3 = arith.constant 3 : index
    %c0_115 = arith.constant 0 : index
    %349 = vector.load %arg2[%c3, %c0_115] : memref<8x128xf32, #tpu.memory_space<vmem>>, vector<1x128xf32>
    tpu.vector_store %arg2[%c3, %c0_115], %73 {strides = array<i32>} : memref<8x128xf32, #tpu.memory_space<vmem>>, vector<1x128xf32>,
    %c4_116 = arith.constant 4 : index
    %c0_117 = arith.constant 0 : index
    %350 = vector.load %arg2[%c4_116, %c0_117] : memref<8x128xf32, #tpu.memory_space<vmem>>, vector<1x128xf32>
    tpu.vector_store %arg2[%c4_116, %c0_117], %171 {strides = array<i32>} : memref<8x128xf32, #tpu.memory_space<vmem>>, vector<1x128xf32>,
    %c5 = arith.constant 5 : index
    %c0_118 = arith.constant 0 : index
    %351 = vector.load %arg2[%c5, %c0_118] : memref<8x128xf32, #tpu.memory_space<vmem>>, vector<1x128xf32>
    tpu.vector_store %arg2[%c5, %c0_118], %325 {strides = array<i32>} : memref<8x128xf32, #tpu.memory_space<vmem>>, vector<1x128xf32>,
    %c6_119 = arith.constant 6 : index
    %c0_120 = arith.constant 0 : index
    %352 = vector.load %arg2[%c6_119, %c0_120] : memref<8x128xf32, #tpu.memory_space<vmem>>, vector<1x128xf32>
    tpu.vector_store %arg2[%c6_119, %c0_120], %194 {strides = array<i32>} : memref<8x128xf32, #tpu.memory_space<vmem>>, vector<1x128xf32>,
    %c7 = arith.constant 7 : index
    %c0_121 = arith.constant 0 : index
    %353 = vector.load %arg2[%c7, %c0_121] : memref<8x128xf32, #tpu.memory_space<vmem>>, vector<1x128xf32>
    tpu.vector_store %arg2[%c7, %c0_121], %292 {strides = array<i32>} : memref<8x128xf32, #tpu.memory_space<vmem>>, vector<1x128xf32>,
    return
  }
  func.func @transform_0(%arg0: i32) -> (i32, i32) {
    %c0_i32 = arith.constant 0 : i32
    %c0_i32_0 = arith.constant 0 : i32
    return %c0_i32, %arg0 : i32, i32
  }
  func.func @transform_1(%arg0: i32) -> (i32, i32) {
    %c0_i32 = arith.constant 0 : i32
    %c0_i32_0 = arith.constant 0 : i32
    return %c0_i32, %arg0 : i32, i32
  }
}

</mosaic_0001>

<llo_original>
// kernel: tpu_custom_call.1
$region0: #{tpu_custom_call.1}
  #allocation0 [shape = 'u32[]', space=smem, size = 0x4, offset = 0x4, fixed_abs, tag = 'smem constant byte address 0x4 - core index']
  #allocation1 [shape = 'u32[144,128]{1,0:T(1,128)}', space=vmem, size = 0x12000, scoped, tag = 'internal scratch']
  %s0 = inlined_call_operand.hbm [shape: f32[56,128], index: 0, kind: input, shape index: {}]
  %s1 = inlined_call_operand.hbm [shape: f32[8,128], index: 1, kind: output, shape index: {}]
  %s2 = sld [smem:[#allocation0]]
  $region18: #{tpu_custom_call.1} parent=0
    _
  %s4 = ssub.s32 1, %s2
  %s5 = scalar_select 0, %s4, %s2
  $region1: #{tpu_custom_call.1} parent=0
    #allocation2 [shape = 'u8[28672]{0}', space=vmem, size = 0x7000, scoped, tag = 'input window, operand 0, single buffered']
    #allocation3 [shape = 's32[1]{0}', space=sflag, size = 0x4, scoped, tag = 'scoped memory for tpu_custom_call.1']
    #allocation4 [shape = 's32[1]{0}', space=sflag, size = 0x4, scoped, tag = 'scoped memory for tpu_custom_call.1']
    #allocation5 [shape = 'u8[4096]{0}', space=vmem, size = 0x1000, scoped, tag = 'output window, operand 0, single buffered']
    %6 = vsyncpa [#allocation3], 0
    %7 = vsyncpa [#allocation4], 0
    // Predicated region
    $region2: #{tpu_custom_call.1} parent=1 // pred_check
      _
    $region3: #{tpu_custom_call.1} parent=1 // pred_check_branch
      %9 = sbr.rel (0) target = $region5
    $region4: #{tpu_custom_call.1} parent=1 // pred_region
      %s11 = ssub.s32 896, 896
      %12 = vsyncadd [#allocation3], %s11
      %s13 = sshll.u32 [#allocation2], 4
      %s14 = int_to_ptr.vmem [resolvable:$true] %s13
      %19 = dma.hbm_to_vmem [thread:$0]  %s0, 896, %s14, [#allocation3], 128, 128, 8
    $region5: #{tpu_custom_call.1} parent=1 // pred_fallthru
      _
    // Predicated region
    $region6: #{tpu_custom_call.1} parent=1 // pred_check
      _
    $region7: #{tpu_custom_call.1} parent=1 // pred_check_branch
      %21 = sbr.rel (0) target = $region9
    $region8: #{tpu_custom_call.1} parent=1 // pred_region
      %22 = dma.done [#allocation3], 896
    $region9: #{tpu_custom_call.1} parent=1 // pred_fallthru
      _
    %v23 = vld [vmem:[#allocation2 + $0x2f] sm:$0x1]
    %v24 = vld [vmem:[#allocation2 + $0x30] sm:$0x3]
    %v25 = vld [vmem:[#allocation2 + $0x32] sm:$0x7]
    %v26 = vld [vmem:[#allocation2 + $0x35] sm:$0x3]
    %vm27 = vcmp.eq.f32.partialorder %v23, 0.0
    %vm28 = vcmp.eq.f32.partialorder %v26, 0.0
    %vm29 = vmor %vm27, %vm28
    %v30 = vld [vmem:[#allocation2] sm:$0xf]
    %v31 = vlaneseq
    %v32 = vshrl.u32 %v31, 7
    %v33 = vcvt.f32.s32.to.zero.pseudo %v23
    %v34 = vlaneseq
    %v35 = vshrl.u32 %v34, 7
    %v36 = vsub.s32 0, %v35
    %v37 = vrot.slane %v33, %v36
    %vm38 = vcmp.eq.s32.totalorder %v32, %v37
    %v39 = vsel %vm38, 1, 0
    %v40 = vcvt.s32.f32 %v39
    %v41 = vmul.f32 %v40, %v30
    %vm42 = vcmask 1043456
    %v43 = vsel %vm42, %v41, 0.0
    %v44 = vrot.slane %v43, 4
    %v45 = vadd.f32 %v43, %v44
    %v46 = vrot.slane %v45, 2
    %v47 = vadd.f32 %v45, %v46
    %v48 = vrot.slane %v47, 1
    %v49 = vadd.f32 %v47, %v48
    %v50 = vsel %vm42, %v30, -inf
    %v51 = vrot.slane %v50, 4
    %v52 = vmax.f32 %v50, %v51
    %v53 = vrot.slane %v52, 2
    %v54 = vmax.f32 %v52, %v53
    %v55 = vrot.slane %v54, 1
    %v56 = vmax.f32 %v54, %v55
    %v57 = vsub.f32 %v30, %v56
    %v58 = vmul.f32 %v57, 1.442695
    %v59 = vpow.pop %v58
    %v60 = vsel %vm42, %v59, 0.0
    %v61 = vrot.slane %v60, 4
    %v62 = vadd.f32 %v60, %v61
    %v63 = vrot.slane %v62, 2
    %v64 = vadd.f32 %v62, %v63
    %v65 = vrot.slane %v64, 1
    %v66 = vadd.f32 %v64, %v65
    %v67 = vlog2.pop %v66
    %v68 = vmul.f32 %v67, 0.6931472
    %v69 = vadd.f32 %v56, %v68
    %v70 = vsub.f32 %v69, %v49
    %v71 = vld [vmem:[#allocation2 + $0x4] sm:$0x3]
    %v72 = vld [vmem:[#allocation2 + $0x6] sm:$0x3]
    %v73 = vsub.f32 %v24, %v71
    %v74 = vsub.f32 0.0, %v72
    %v75 = vmul.f32 %v74, 1.442695
    %v76 = vpow.pop %v75
    %v77 = vmul.f32 %v73, %v76
    %v78 = vmul.f32 %v77, -0.5
    %v79 = vmul.f32 %v78, %v77
    %v80 = vsub.f32 %v79, %v72
    %v81 = vsub.f32 %v80, 0.9189385
    %vm82 = vcmask 1041408
    %v83 = vsel %vm82, %v81, 0.0
    %v84 = vrot.slane %v83, 4
    %v85 = vadd.f32 %v83, %v84
    %v86 = vrot.slane %v85, 2
    %v87 = vadd.f32 %v85, %v86
    %v88 = vrot.slane %v87, 1
    %v89 = vadd.f32 %v87, %v88
    %v90 = vsub.f32 0.0, %v89
    %v91 = vsel %vm27, 0.0, %v90
    %v92 = vld [vmem:[#allocation2 + $0x8] sm:$0x3]
    %v93 = vld [vmem:[#allocation2 + $0xa] sm:$0x3]
    %v94 = vadd.f32 %v25, 1e-06
    %v95 = vlog2.pop %v94
    %v96 = vmul.f32 %v95, 0.6931472
    %v97 = vsub.f32 %v96, %v92
    %v98 = vsub.f32 0.0, %v93
    %v99 = vmul.f32 %v98, 1.442695
    %v100 = vpow.pop %v99
    %v101 = vmul.f32 %v97, %v100
    %v102 = vsub.f32 0.0, %v96
    %v103 = vsub.f32 %v102, %v93
    %v104 = vsub.f32 %v103, 0.9189385
    %v105 = vmul.f32 %v101, 0.5
    %v106 = vmul.f32 %v105, %v101
    %v107 = vsub.f32 %v104, %v106
    %v108 = vsel %vm82, %v107, 0.0
    %v109 = vrot.slane %v108, 4
    %v110 = vadd.f32 %v108, %v109
    %v111 = vrot.slane %v110, 2
    %v112 = vadd.f32 %v110, %v111
    %v113 = vrot.slane %v112, 1
    %v114 = vadd.f32 %v112, %v113
    %v115 = vsub.f32 0.0, %v114
    %v116 = vsel %vm27, 0.0, %v115
    %v117 = vld [vmem:[#allocation2 + $0xc] sm:$0xf]
    %v118 = vld [vmem:[#allocation2 + $0x10] sm:$0xf]
    %v119 = vld [vmem:[#allocation2 + $0x14] sm:$0xf]
    %v120 = vld [vmem:[#allocation2 + $0x18] sm:$0xf]
    %v121 = vand.u32 2147483647, %v25
    %vm122 = vcmp.le.f32.partialorder %v121, 0.7853982
    %vm123 = vcmp.lt.s32.totalorder %v25, 0
    %v124 = vand.u32 %v25, 2139095040
    %v125 = vshrl.u32 %v124, 23
    %v126 = vsub.s32 %v125, 127
    %v127 = vand.u32 2147483647, %v25
    %v128 = vand.u32 %v127, 8388607
    %v129 = vor.u32 %v128, 8388608
    %v130 = vsub.s32 0, %v129
    %v131 = vadd.s32 %v126, 1
    %vm132 = vcmp.gt.s32.totalorder %v131, 0
    %v133 = vsel %vm132, %v131, 0
    %v134 = vshrl.u32 %v133, 5
    %v135 = vand.u32 %v133, 31
    %v136 = vsub.s32 32, %v135
    %v137 = vshrl.u32 683565275, %v136
    %v138 = vshll.u32 683565275, %v135
    %v139 = vshrl.u32 2475754826, %v136
    %v140 = vor.u32 %v138, %v139
    %v141 = vshll.u32 2475754826, %v135
    %v142 = vshrl.u32 2131351028, %v136
    %v143 = vor.u32 %v141, %v142
    %v144 = vshll.u32 2131351028, %v135
    %v145 = vshrl.u32 2102212464, %v136
    %v146 = vor.u32 %v144, %v145
    %v147 = vshll.u32 2102212464, %v135
    %v148 = vshrl.u32 920167782, %v136
    %v149 = vor.u32 %v147, %v148
    %v150 = vshll.u32 920167782, %v135
    %v151 = vshrl.u32 1326507024, %v136
    %v152 = vor.u32 %v150, %v151
    %vm153 = vcmp.lt.s32.totalorder %v134, 1
    %vm154 = vcmp.lt.s32.totalorder %v134, 2
    %vm155 = vcmp.lt.s32.totalorder %v134, 3
    %vm156 = vcmp.lt.s32.totalorder %v134, 4
    %v157 = vsel %vm153, %v137, %v140
    %v158 = vsel %vm156, %v146, 2102212464
    %v159 = vsel %vm155, %v143, %v158
    %v160 = vsel %vm154, %v157, %v159
    %v161 = vsel %vm153, %v140, %v143
    %v162 = vsel %vm156, %v149, 920167782
    %v163 = vsel %vm155, %v146, %v162
    %v164 = vsel %vm154, %v161, %v163
    %v165 = vsel %vm153, %v143, %v146
    %v166 = vsel %vm156, %v152, 1326507024
    %v167 = vsel %vm155, %v149, %v166
    %v168 = vsel %vm154, %v165, %v167
    %v169 = vshll.u32 %v129, 8
    %v170 = vmul.u32.u64.compose %v169, %v168
    %v171 = vextract.low.u32 %v170
    %v172 = vextract.high.u32 %v170
    %v173 = vmul.u32.u64.compose %v169, %v164
    %v174 = vextract.low.u32 %v173
    %v175 = vextract.high.u32 %v173
    %v176 = vmul.u32 %v169, %v160
    %v177 = vadd.s32 %v172, %v174
    %vm178 = vc.u32 %v172, %v174
    %v179 = vadd.s32 %v175, 1
    %v180 = vsel %vm178, %v179, %v175
    %v181 = vadd.s32 %v176, %v180
    %v182 = vadd.s32 %v181, 536870912
    %v183 = vshrl.u32 %v182, 30
    %v184 = vshll.u32 %v183, 30
    %v185 = vsub.s32 %v181, %v184
    %vm186 = vcmp.lt.s32.totalorder %v185, 0
    %v187 = vsub.s32 0, %v185
    %v188 = vsel %vm186, %v187, %v185
    %v189 = vclz %v188
    %v190 = vsub.s32 %v189, 2
    %vm191 = vcmp.gt.s32.totalorder 0, %v190
    %v192 = vsel %vm191, 0, %v190
    %v193 = vsub.s32 32, %v192
    %v194 = vshll.u32 %v185, %v192
    %v195 = vshrl.u32 %v177, %v193
    %v196 = vor.u32 %v194, %v195
    %v197 = vsub.s32 4294967266, %v192
    %v198 = vadd.s32 %v197, 127
    %v199 = vshll.u32 %v198, 23
    %v200 = vor.u32 4788187, %v199
    %v201 = vand.u32 2147483647, %v200
    %v203 = vcvt.s32.f32 %v196
    %v204 = vmul.f32 %v203, %v201
    %v205 = vxor.u32 %v204, 2147483648
    %v206 = vsel %vm123, %v205, %v204
    %v207 = vsub.s32 4, %v183
    %v208 = vsel %vm123, %v207, %v183
    %v209 = vsel %vm122, %v25, %v206
    %v210 = vsel %vm122, 0, %v208
    %v211 = vcosq.f32.pop %v209
    %v212 = vsinq.f32.pop %v209
    %vm213 = vweird.f32 %v25
    %v214 = vand.u32 %v210, 3
    %vm215 = vcmp.lt.s32.totalorder %v214, 2
    %vm216 = vcmp.eq.s32.totalorder %v214, 0
    %v217 = vxor.u32 %v212, 2147483648
    %v218 = vsel %vm216, %v211, %v217
    %vm219 = vcmp.eq.s32.totalorder %v214, 2
    %v220 = vxor.u32 %v211, 2147483648
    %v221 = vsel %vm219, %v220, %v212
    %v222 = vsel %vm215, %v218, %v221
    %v223 = vsel %vm213, nan, %v222
    %v224 = vand.u32 2147483647, %v25
    %vm225 = vcmp.le.f32.partialorder %v224, 0.7853982
    %vm226 = vcmp.lt.s32.totalorder %v25, 0
    %v227 = vand.u32 %v25, 2139095040
    %v228 = vshrl.u32 %v227, 23
    %v229 = vsub.s32 %v228, 127
    %v230 = vand.u32 2147483647, %v25
    %v231 = vand.u32 %v230, 8388607
    %v232 = vor.u32 %v231, 8388608
    %v233 = vsub.s32 0, %v232
    %v234 = vadd.s32 %v229, 1
    %vm235 = vcmp.gt.s32.totalorder %v234, 0
    %v236 = vsel %vm235, %v234, 0
    %v237 = vshrl.u32 %v236, 5
    %v238 = vand.u32 %v236, 31
    %v239 = vsub.s32 32, %v238
    %v240 = vshrl.u32 683565275, %v239
    %v241 = vshll.u32 683565275, %v238
    %v242 = vshrl.u32 2475754826, %v239
    %v243 = vor.u32 %v241, %v242
    %v244 = vshll.u32 2475754826, %v238
    %v245 = vshrl.u32 2131351028, %v239
    %v246 = vor.u32 %v244, %v245
    %v247 = vshll.u32 2131351028, %v238
    %v248 = vshrl.u32 2102212464, %v239
    %v249 = vor.u32 %v247, %v248
    %v250 = vshll.u32 2102212464, %v238
    %v251 = vshrl.u32 920167782, %v239
    %v252 = vor.u32 %v250, %v251
    %v253 = vshll.u32 920167782, %v238
    %v254 = vshrl.u32 1326507024, %v239
    %v255 = vor.u32 %v253, %v254
    %vm256 = vcmp.lt.s32.totalorder %v237, 1
    %vm257 = vcmp.lt.s32.totalorder %v237, 2
    %vm258 = vcmp.lt.s32.totalorder %v237, 3
    %vm259 = vcmp.lt.s32.totalorder %v237, 4
    %v260 = vsel %vm256, %v240, %v243
    %v261 = vsel %vm259, %v249, 2102212464
    %v262 = vsel %vm258, %v246, %v261
    %v263 = vsel %vm257, %v260, %v262
    %v264 = vsel %vm256, %v243, %v246
    %v265 = vsel %vm259, %v252, 920167782
    %v266 = vsel %vm258, %v249, %v265
    %v267 = vsel %vm257, %v264, %v266
    %v268 = vsel %vm256, %v246, %v249
    %v269 = vsel %vm259, %v255, 1326507024
    %v270 = vsel %vm258, %v252, %v269
    %v271 = vsel %vm257, %v268, %v270
    %v272 = vshll.u32 %v232, 8
    %v273 = vmul.u32.u64.compose %v272, %v271
    %v274 = vextract.low.u32 %v273
    %v275 = vextract.high.u32 %v273
    %v276 = vmul.u32.u64.compose %v272, %v267
    %v277 = vextract.low.u32 %v276
    %v278 = vextract.high.u32 %v276
    %v279 = vmul.u32 %v272, %v263
    %v280 = vadd.s32 %v275, %v277
    %vm281 = vc.u32 %v275, %v277
    %v282 = vadd.s32 %v278, 1
    %v283 = vsel %vm281, %v282, %v278
    %v284 = vadd.s32 %v279, %v283
    %v285 = vadd.s32 %v284, 536870912
    %v286 = vshrl.u32 %v285, 30
    %v287 = vshll.u32 %v286, 30
    %v288 = vsub.s32 %v284, %v287
    %vm289 = vcmp.lt.s32.totalorder %v288, 0
    %v290 = vsub.s32 0, %v288
    %v291 = vsel %vm289, %v290, %v288
    %v292 = vclz %v291
    %v293 = vsub.s32 %v292, 2
    %vm294 = vcmp.gt.s32.totalorder 0, %v293
    %v295 = vsel %vm294, 0, %v293
    %v296 = vsub.s32 32, %v295
    %v297 = vshll.u32 %v288, %v295
    %v298 = vshrl.u32 %v280, %v296
    %v299 = vor.u32 %v297, %v298
    %v300 = vsub.s32 4294967266, %v295
    %v301 = vadd.s32 %v300, 127
    %v302 = vshll.u32 %v301, 23
    %v303 = vor.u32 4788187, %v302
    %v304 = vand.u32 2147483647, %v303
    %v306 = vcvt.s32.f32 %v299
    %v307 = vmul.f32 %v306, %v304
    %v308 = vxor.u32 %v307, 2147483648
    %v309 = vsel %vm226, %v308, %v307
    %v310 = vsub.s32 4, %v286
    %v311 = vsel %vm226, %v310, %v286
    %v312 = vsel %vm225, %v25, %v309
    %v313 = vsel %vm225, 0, %v311
    %v314 = vcosq.f32.pop %v312
    %v315 = vsinq.f32.pop %v312
    %vm316 = vweird.f32 %v25
    %v317 = vadd.s32 %v313, 3
    %v318 = vand.u32 %v317, 3
    %vm319 = vcmp.lt.s32.totalorder %v318, 2
    %vm320 = vcmp.eq.s32.totalorder %v318, 0
    %v321 = vxor.u32 %v315, 2147483648
    %v322 = vsel %vm320, %v314, %v321
    %vm323 = vcmp.eq.s32.totalorder %v318, 2
    %v324 = vxor.u32 %v314, 2147483648
    %v325 = vsel %vm323, %v324, %v315
    %v326 = vsel %vm319, %v322, %v325
    %v327 = vsel %vm316, nan, %v326
    %v328 = vsel %vm42, %v117, -inf
    %v329 = vrot.slane %v328, 4
    %v330 = vmax.f32 %v328, %v329
    %v331 = vrot.slane %v330, 2
    %v332 = vmax.f32 %v330, %v331
    %v333 = vrot.slane %v332, 1
    %v334 = vmax.f32 %v332, %v333
    %v335 = vsub.f32 %v117, %v334
    %v336 = vmul.f32 %v335, 1.442695
    %v337 = vpow.pop %v336
    %v338 = vsel %vm42, %v337, 0.0
    %v339 = vrot.slane %v338, 4
    %v340 = vadd.f32 %v338, %v339
    %v341 = vrot.slane %v340, 2
    %v342 = vadd.f32 %v340, %v341
    %v343 = vrot.slane %v342, 1
    %v344 = vadd.f32 %v342, %v343
    %v345 = vlog2.pop %v344
    %v346 = vmul.f32 %v345, 0.6931472
    %v347 = vadd.f32 %v334, %v346
    %v348 = vlaneseq
    %v349 = vshrl.u32 %v348, 7
    %v350 = vsub.s32 2, %v349
    %v351 = vrot.slane %v223, %v350
    %v352 = vmul.f32 %v351, %v118
    %v353 = vlaneseq
    %v354 = vshrl.u32 %v353, 7
    %v355 = vsub.s32 2, %v354
    %v356 = vrot.slane %v327, %v355
    %v357 = vmul.f32 %v356, %v119
    %v358 = vadd.f32 %v352, %v357
    %v359 = vmul.f32 %v120, %v358
    %v360 = vrcp.pop 3.75
    %v361 = vmul.f32 %v120, %v360
    %v362 = vmul.f32 %v361, %v361
    %v363 = vmul.f32 %v362, 0.0045813
    %v364 = vadd.f32 %v363, 0.0360768
    %v365 = vmul.f32 %v362, %v364
    %v366 = vadd.f32 %v365, 0.2659732
    %v367 = vmul.f32 %v362, %v366
    %v368 = vadd.f32 %v367, 1.2067492
    %v369 = vmul.f32 %v362, %v368
    %v370 = vadd.f32 %v369, 3.0899425
    %v371 = vmul.f32 %v362, %v370
    %v372 = vadd.f32 %v371, 3.5156229
    %v373 = vmul.f32 %v362, %v372
    %v374 = vadd.f32 %v373, 1.0
    %v375 = vlog2.pop %v374
    %v376 = vmul.f32 %v375, 0.6931472
    %v377 = vrcp.pop %v120
    %v378 = vmul.f32 3.75, %v377
    %v379 = vlog2.pop %v120
    %v380 = vmul.f32 %v379, 0.6931472
    %v381 = vmul.f32 %v380, 0.5
    %v382 = vsub.f32 %v120, %v381
    %v383 = vmul.f32 %v378, 0.00392377
    %v384 = vadd.f32 %v383, -0.01647633
    %v385 = vmul.f32 %v378, %v384
    %v386 = vadd.f32 %v385, 0.02635537
    %v387 = vmul.f32 %v378, %v386
    %v388 = vadd.f32 %v387, -0.02057706
    %v389 = vmul.f32 %v378, %v388
    %v390 = vadd.f32 %v389, 0.00916281
    %v391 = vmul.f32 %v378, %v390
    %v392 = vadd.f32 %v391, -0.00157565
    %v393 = vmul.f32 %v378, %v392
    %v394 = vadd.f32 %v393, 0.00225319
    %v395 = vmul.f32 %v378, %v394
    %v396 = vadd.f32 %v395, 0.01328592
    %v397 = vmul.f32 %v378, %v396
    %v398 = vadd.f32 %v397, 0.3989423
    %v399 = vlog2.pop %v398
    %v400 = vmul.f32 %v399, 0.6931472
    %v401 = vadd.f32 %v382, %v400
    %vm402 = vcmp.lt.f32.partialorder %v120, 3.75
    %v403 = vsel %vm402, %v376, %v401
    %v404 = vsub.f32 %v359, %v403
    %v405 = vadd.f32 %v404, %v117
    %v406 = vsel %vm42, %v405, -inf
    %v407 = vrot.slane %v406, 4
    %v408 = vmax.f32 %v406, %v407
    %v409 = vrot.slane %v408, 2
    %v410 = vmax.f32 %v408, %v409
    %v411 = vrot.slane %v410, 1
    %v412 = vmax.f32 %v410, %v411
    %v413 = vsub.f32 %v405, %v412
    %v414 = vmul.f32 %v413, 1.442695
    %v415 = vpow.pop %v414
    %v416 = vsel %vm42, %v415, 0.0
    %v417 = vrot.slane %v416, 4
    %v418 = vadd.f32 %v416, %v417
    %v419 = vrot.slane %v418, 2
    %v420 = vadd.f32 %v418, %v419
    %v421 = vrot.slane %v420, 1
    %v422 = vadd.f32 %v420, %v421
    %v423 = vlog2.pop %v422
    %v424 = vmul.f32 %v423, 0.6931472
    %v425 = vadd.f32 %v412, %v424
    %v426 = vsub.f32 0.0, %v425
    %v427 = vadd.f32 %v426, %v347
    %v428 = vadd.f32 %v427, 1.837877
    %v429 = vsel %vm27, 0.0, %v428
    %v430 = vld [vmem:[#allocation2 + $0x1c] sm:$0x1]
    %v431 = vld [vmem:[#allocation2 + $0x1d] sm:$0x1]
    %v432 = vadd.f32 %v26, 1e-06
    %v433 = vlog2.pop %v432
    %v434 = vmul.f32 %v433, 0.6931472
    %v435 = vsub.f32 %v434, %v430
    %v436 = vsub.f32 0.0, %v431
    %v437 = vmul.f32 %v436, 1.442695
    %v438 = vpow.pop %v437
    %v439 = vmul.f32 %v435, %v438
    %v440 = vsub.f32 0.0, %v434
    %v441 = vsub.f32 %v440, %v431
    %v442 = vsub.f32 %v441, 0.9189385
    %v443 = vmul.f32 %v439, 0.5
    %v444 = vmul.f32 %v443, %v439
    %v445 = vsub.f32 %v442, %v444
    %v446 = vsub.f32 0.0, %v445
    %v447 = vsel %vm29, 0.0, %v446
    %v448 = vld [vmem:[#allocation2 + $0x1e] sm:$0xf]
    %v449 = vld [vmem:[#allocation2 + $0x22] sm:$0xf]
    %v450 = vld [vmem:[#allocation2 + $0x26] sm:$0xf]
    %v451 = vld [vmem:[#allocation2 + $0x2a] sm:$0xf]
    %v452 = vand.u32 2147483647, %v26
    %vm453 = vcmp.le.f32.partialorder %v452, 0.7853982
    %vm454 = vcmp.lt.s32.totalorder %v26, 0
    %v455 = vand.u32 %v26, 2139095040
    %v456 = vshrl.u32 %v455, 23
    %v457 = vsub.s32 %v456, 127
    %v458 = vand.u32 2147483647, %v26
    %v459 = vand.u32 %v458, 8388607
    %v460 = vor.u32 %v459, 8388608
    %v461 = vsub.s32 0, %v460
    %v462 = vadd.s32 %v457, 1
    %vm463 = vcmp.gt.s32.totalorder %v462, 0
    %v464 = vsel %vm463, %v462, 0
    %v465 = vshrl.u32 %v464, 5
    %v466 = vand.u32 %v464, 31
    %v467 = vsub.s32 32, %v466
    %v468 = vshrl.u32 683565275, %v467
    %v469 = vshll.u32 683565275, %v466
    %v470 = vshrl.u32 2475754826, %v467
    %v471 = vor.u32 %v469, %v470
    %v472 = vshll.u32 2475754826, %v466
    %v473 = vshrl.u32 2131351028, %v467
    %v474 = vor.u32 %v472, %v473
    %v475 = vshll.u32 2131351028, %v466
    %v476 = vshrl.u32 2102212464, %v467
    %v477 = vor.u32 %v475, %v476
    %v478 = vshll.u32 2102212464, %v466
    %v479 = vshrl.u32 920167782, %v467
    %v480 = vor.u32 %v478, %v479
    %v481 = vshll.u32 920167782, %v466
    %v482 = vshrl.u32 1326507024, %v467
    %v483 = vor.u32 %v481, %v482
    %vm484 = vcmp.lt.s32.totalorder %v465, 1
    %vm485 = vcmp.lt.s32.totalorder %v465, 2
    %vm486 = vcmp.lt.s32.totalorder %v465, 3
    %vm487 = vcmp.lt.s32.totalorder %v465, 4
    %v488 = vsel %vm484, %v468, %v471
    %v489 = vsel %vm487, %v477, 2102212464
    %v490 = vsel %vm486, %v474, %v489
    %v491 = vsel %vm485, %v488, %v490
    %v492 = vsel %vm484, %v471, %v474
    %v493 = vsel %vm487, %v480, 920167782
    %v494 = vsel %vm486, %v477, %v493
    %v495 = vsel %vm485, %v492, %v494
    %v496 = vsel %vm484, %v474, %v477
    %v497 = vsel %vm487, %v483, 1326507024
    %v498 = vsel %vm486, %v480, %v497
    %v499 = vsel %vm485, %v496, %v498
    %v500 = vshll.u32 %v460, 8
    %v501 = vmul.u32.u64.compose %v500, %v499
    %v502 = vextract.low.u32 %v501
    %v503 = vextract.high.u32 %v501
    %v504 = vmul.u32.u64.compose %v500, %v495
    %v505 = vextract.low.u32 %v504
    %v506 = vextract.high.u32 %v504
    %v507 = vmul.u32 %v500, %v491
    %v508 = vadd.s32 %v503, %v505
    %vm509 = vc.u32 %v503, %v505
    %v510 = vadd.s32 %v506, 1
    %v511 = vsel %vm509, %v510, %v506
    %v512 = vadd.s32 %v507, %v511
    %v513 = vadd.s32 %v512, 536870912
    %v514 = vshrl.u32 %v513, 30
    %v515 = vshll.u32 %v514, 30
    %v516 = vsub.s32 %v512, %v515
    %vm517 = vcmp.lt.s32.totalorder %v516, 0
    %v518 = vsub.s32 0, %v516
    %v519 = vsel %vm517, %v518, %v516
    %v520 = vclz %v519
    %v521 = vsub.s32 %v520, 2
    %vm522 = vcmp.gt.s32.totalorder 0, %v521
    %v523 = vsel %vm522, 0, %v521
    %v524 = vsub.s32 32, %v523
    %v525 = vshll.u32 %v516, %v523
    %v526 = vshrl.u32 %v508, %v524
    %v527 = vor.u32 %v525, %v526
    %v528 = vsub.s32 4294967266, %v523
    %v529 = vadd.s32 %v528, 127
    %v530 = vshll.u32 %v529, 23
    %v531 = vor.u32 4788187, %v530
    %v532 = vand.u32 2147483647, %v531
    %v534 = vcvt.s32.f32 %v527
    %v535 = vmul.f32 %v534, %v532
    %v536 = vxor.u32 %v535, 2147483648
    %v537 = vsel %vm454, %v536, %v535
    %v538 = vsub.s32 4, %v514
    %v539 = vsel %vm454, %v538, %v514
    %v540 = vsel %vm453, %v26, %v537
    %v541 = vsel %vm453, 0, %v539
    %v542 = vcosq.f32.pop %v540
    %v543 = vsinq.f32.pop %v540
    %vm544 = vweird.f32 %v26
    %v545 = vand.u32 %v541, 3
    %vm546 = vcmp.lt.s32.totalorder %v545, 2
    %vm547 = vcmp.eq.s32.totalorder %v545, 0
    %v548 = vxor.u32 %v543, 2147483648
    %v549 = vsel %vm547, %v542, %v548
    %vm550 = vcmp.eq.s32.totalorder %v545, 2
    %v551 = vxor.u32 %v542, 2147483648
    %v552 = vsel %vm550, %v551, %v543
    %v553 = vsel %vm546, %v549, %v552
    %v554 = vsel %vm544, nan, %v553
    %v555 = vand.u32 2147483647, %v26
    %vm556 = vcmp.le.f32.partialorder %v555, 0.7853982
    %vm557 = vcmp.lt.s32.totalorder %v26, 0
    %v558 = vand.u32 %v26, 2139095040
    %v559 = vshrl.u32 %v558, 23
    %v560 = vsub.s32 %v559, 127
    %v561 = vand.u32 2147483647, %v26
    %v562 = vand.u32 %v561, 8388607
    %v563 = vor.u32 %v562, 8388608
    %v564 = vsub.s32 0, %v563
    %v565 = vadd.s32 %v560, 1
    %vm566 = vcmp.gt.s32.totalorder %v565, 0
    %v567 = vsel %vm566, %v565, 0
    %v568 = vshrl.u32 %v567, 5
    %v569 = vand.u32 %v567, 31
    %v570 = vsub.s32 32, %v569
    %v571 = vshrl.u32 683565275, %v570
    %v572 = vshll.u32 683565275, %v569
    %v573 = vshrl.u32 2475754826, %v570
    %v574 = vor.u32 %v572, %v573
    %v575 = vshll.u32 2475754826, %v569
    %v576 = vshrl.u32 2131351028, %v570
    %v577 = vor.u32 %v575, %v576
    %v578 = vshll.u32 2131351028, %v569
    %v579 = vshrl.u32 2102212464, %v570
    %v580 = vor.u32 %v578, %v579
    %v581 = vshll.u32 2102212464, %v569
    %v582 = vshrl.u32 920167782, %v570
    %v583 = vor.u32 %v581, %v582
    %v584 = vshll.u32 920167782, %v569
    %v585 = vshrl.u32 1326507024, %v570
    %v586 = vor.u32 %v584, %v585
    %vm587 = vcmp.lt.s32.totalorder %v568, 1
    %vm588 = vcmp.lt.s32.totalorder %v568, 2
    %vm589 = vcmp.lt.s32.totalorder %v568, 3
    %vm590 = vcmp.lt.s32.totalorder %v568, 4
    %v591 = vsel %vm587, %v571, %v574
    %v592 = vsel %vm590, %v580, 2102212464
    %v593 = vsel %vm589, %v577, %v592
    %v594 = vsel %vm588, %v591, %v593
    %v595 = vsel %vm587, %v574, %v577
    %v596 = vsel %vm590, %v583, 920167782
    %v597 = vsel %vm589, %v580, %v596
    %v598 = vsel %vm588, %v595, %v597
    %v599 = vsel %vm587, %v577, %v580
    %v600 = vsel %vm590, %v586, 1326507024
    %v601 = vsel %vm589, %v583, %v600
    %v602 = vsel %vm588, %v599, %v601
    %v603 = vshll.u32 %v563, 8
    %v604 = vmul.u32.u64.compose %v603, %v602
    %v605 = vextract.low.u32 %v604
    %v606 = vextract.high.u32 %v604
    %v607 = vmul.u32.u64.compose %v603, %v598
    %v608 = vextract.low.u32 %v607
    %v609 = vextract.high.u32 %v607
    %v610 = vmul.u32 %v603, %v594
    %v611 = vadd.s32 %v606, %v608
    %vm612 = vc.u32 %v606, %v608
    %v613 = vadd.s32 %v609, 1
    %v614 = vsel %vm612, %v613, %v609
    %v615 = vadd.s32 %v610, %v614
    %v616 = vadd.s32 %v615, 536870912
    %v617 = vshrl.u32 %v616, 30
    %v618 = vshll.u32 %v617, 30
    %v619 = vsub.s32 %v615, %v618
    %vm620 = vcmp.lt.s32.totalorder %v619, 0
    %v621 = vsub.s32 0, %v619
    %v622 = vsel %vm620, %v621, %v619
    %v623 = vclz %v622
    %v624 = vsub.s32 %v623, 2
    %vm625 = vcmp.gt.s32.totalorder 0, %v624
    %v626 = vsel %vm625, 0, %v624
    %v627 = vsub.s32 32, %v626
    %v628 = vshll.u32 %v619, %v626
    %v629 = vshrl.u32 %v611, %v627
    %v630 = vor.u32 %v628, %v629
    %v631 = vsub.s32 4294967266, %v626
    %v632 = vadd.s32 %v631, 127
    %v633 = vshll.u32 %v632, 23
    %v634 = vor.u32 4788187, %v633
    %v635 = vand.u32 2147483647, %v634
    %v637 = vcvt.s32.f32 %v630
    %v638 = vmul.f32 %v637, %v635
    %v639 = vxor.u32 %v638, 2147483648
    %v640 = vsel %vm557, %v639, %v638
    %v641 = vsub.s32 4, %v617
    %v642 = vsel %vm557, %v641, %v617
    %v643 = vsel %vm556, %v26, %v640
    %v644 = vsel %vm556, 0, %v642
    %v645 = vcosq.f32.pop %v643
    %v646 = vsinq.f32.pop %v643
    %vm647 = vweird.f32 %v26
    %v648 = vadd.s32 %v644, 3
    %v649 = vand.u32 %v648, 3
    %vm650 = vcmp.lt.s32.totalorder %v649, 2
    %vm651 = vcmp.eq.s32.totalorder %v649, 0
    %v652 = vxor.u32 %v646, 2147483648
    %v653 = vsel %vm651, %v645, %v652
    %vm654 = vcmp.eq.s32.totalorder %v649, 2
    %v655 = vxor.u32 %v645, 2147483648
    %v656 = vsel %vm654, %v655, %v646
    %v657 = vsel %vm650, %v653, %v656
    %v658 = vsel %vm647, nan, %v657
    %v659 = vsel %vm42, %v448, -inf
    %v660 = vrot.slane %v659, 4
    %v661 = vmax.f32 %v659, %v660
    %v662 = vrot.slane %v661, 2
    %v663 = vmax.f32 %v661, %v662
    %v664 = vrot.slane %v663, 1
    %v665 = vmax.f32 %v663, %v664
    %v666 = vsub.f32 %v448, %v665
    %v667 = vmul.f32 %v666, 1.442695
    %v668 = vpow.pop %v667
    %v669 = vsel %vm42, %v668, 0.0
    %v670 = vrot.slane %v669, 4
    %v671 = vadd.f32 %v669, %v670
    %v672 = vrot.slane %v671, 2
    %v673 = vadd.f32 %v671, %v672
    %v674 = vrot.slane %v673, 1
    %v675 = vadd.f32 %v673, %v674
    %v676 = vlog2.pop %v675
    %v677 = vmul.f32 %v676, 0.6931472
    %v678 = vadd.f32 %v665, %v677
    %v679 = vlaneseq
    %v680 = vshrl.u32 %v679, 7
    %v681 = vsub.s32 1, %v680
    %v682 = vrot.slane %v554, %v681
    %v683 = vmul.f32 %v682, %v449
    %v684 = vlaneseq
    %v685 = vshrl.u32 %v684, 7
    %v686 = vsub.s32 1, %v685
    %v687 = vrot.slane %v658, %v686
    %v688 = vmul.f32 %v687, %v450
    %v689 = vadd.f32 %v683, %v688
    %v690 = vmul.f32 %v451, %v689
    %v691 = vmul.f32 %v451, %v360
    %v692 = vmul.f32 %v691, %v691
    %v693 = vmul.f32 %v692, 0.0045813
    %v694 = vadd.f32 %v693, 0.0360768
    %v695 = vmul.f32 %v692, %v694
    %v696 = vadd.f32 %v695, 0.2659732
    %v697 = vmul.f32 %v692, %v696
    %v698 = vadd.f32 %v697, 1.2067492
    %v699 = vmul.f32 %v692, %v698
    %v700 = vadd.f32 %v699, 3.0899425
    %v701 = vmul.f32 %v692, %v700
    %v702 = vadd.f32 %v701, 3.5156229
    %v703 = vmul.f32 %v692, %v702
    %v704 = vadd.f32 %v703, 1.0
    %v705 = vlog2.pop %v704
    %v706 = vmul.f32 %v705, 0.6931472
    %v707 = vrcp.pop %v451
    %v708 = vmul.f32 3.75, %v707
    %v709 = vlog2.pop %v451
    %v710 = vmul.f32 %v709, 0.6931472
    %v711 = vmul.f32 %v710, 0.5
    %v712 = vsub.f32 %v451, %v711
    %v713 = vmul.f32 %v708, 0.00392377
    %v714 = vadd.f32 %v713, -0.01647633
    %v715 = vmul.f32 %v708, %v714
    %v716 = vadd.f32 %v715, 0.02635537
    %v717 = vmul.f32 %v708, %v716
    %v718 = vadd.f32 %v717, -0.02057706
    %v719 = vmul.f32 %v708, %v718
    %v720 = vadd.f32 %v719, 0.00916281
    %v721 = vmul.f32 %v708, %v720
    %v722 = vadd.f32 %v721, -0.00157565
    %v723 = vmul.f32 %v708, %v722
    %v724 = vadd.f32 %v723, 0.00225319
    %v725 = vmul.f32 %v708, %v724
    %v726 = vadd.f32 %v725, 0.01328592
    %v727 = vmul.f32 %v708, %v726
    %v728 = vadd.f32 %v727, 0.3989423
    %v729 = vlog2.pop %v728
    %v730 = vmul.f32 %v729, 0.6931472
    %v731 = vadd.f32 %v712, %v730
    %vm732 = vcmp.lt.f32.partialorder %v451, 3.75
    %v733 = vsel %vm732, %v706, %v731
    %v734 = vsub.f32 %v690, %v733
    %v735 = vadd.f32 %v734, %v448
    %v736 = vsel %vm42, %v735, -inf
    %v737 = vrot.slane %v736, 4
    %v738 = vmax.f32 %v736, %v737
    %v739 = vrot.slane %v738, 2
    %v740 = vmax.f32 %v738, %v739
    %v741 = vrot.slane %v740, 1
    %v742 = vmax.f32 %v740, %v741
    %v743 = vsub.f32 %v735, %v742
    %v744 = vmul.f32 %v743, 1.442695
    %v745 = vpow.pop %v744
    %v746 = vsel %vm42, %v745, 0.0
    %v747 = vrot.slane %v746, 4
    %v748 = vadd.f32 %v746, %v747
    %v749 = vrot.slane %v748, 2
    %v750 = vadd.f32 %v748, %v749
    %v751 = vrot.slane %v750, 1
    %v752 = vadd.f32 %v750, %v751
    %v753 = vlog2.pop %v752
    %v754 = vmul.f32 %v753, 0.6931472
    %v755 = vadd.f32 %v742, %v754
    %v756 = vsub.f32 0.0, %v755
    %v757 = vadd.f32 %v756, %v678
    %v758 = vadd.f32 %v757, 1.837877
    %v759 = vsel %vm29, 0.0, %v758
    %v760 = vld [vmem:[#allocation2 + $0x2e] sm:$0x1]
    %vm761 = vcmp.ge.f32.partialorder %v760, 0.0
    %v762 = vsub.f32 0.0, %v760
    %v763 = vmul.f32 %v762, 1.442695
    %v764 = vpow.pop %v763
    %v765 = vadd.f32 %v764, 1.0
    %v766 = vlog2.pop %v765
    %v767 = vmul.f32 %v766, 0.6931472
    %v768 = vmul.f32 -0.5, %v764
    %v769 = vadd.f32 %v768, 1.0
    %v770 = vmul.f32 %v769, %v764
    %v771 = vand.u32 2147483647, %v764
    %vm772 = vcmp.lt.f32.partialorder %v771, 0.0004427343
    %v773 = vsel %vm772, %v770, %v767
    %v774 = vsub.f32 0.0, %v773
    %v775 = vmul.f32 %v760, 1.442695
    %v776 = vpow.pop %v775
    %v777 = vadd.f32 %v776, 1.0
    %v778 = vlog2.pop %v777
    %v779 = vmul.f32 %v778, 0.6931472
    %v780 = vmul.f32 -0.5, %v776
    %v781 = vadd.f32 %v780, 1.0
    %v782 = vmul.f32 %v781, %v776
    %v783 = vand.u32 2147483647, %v776
    %vm784 = vcmp.lt.f32.partialorder %v783, 0.0004427343
    %v785 = vsel %vm784, %v782, %v779
    %v786 = vsub.f32 %v760, %v785
    %v787 = vsel %vm761, %v774, %v786
    %vm788 = vcmp.ge.f32.partialorder %v762, 0.0
    %v789 = vsub.f32 0.0, %v762
    %v790 = vmul.f32 %v789, 1.442695
    %v791 = vpow.pop %v790
    %v792 = vadd.f32 %v791, 1.0
    %v793 = vlog2.pop %v792
    %v794 = vmul.f32 %v793, 0.6931472
    %v795 = vmul.f32 -0.5, %v791
    %v796 = vadd.f32 %v795, 1.0
    %v797 = vmul.f32 %v796, %v791
    %v798 = vand.u32 2147483647, %v791
    %vm799 = vcmp.lt.f32.partialorder %v798, 0.0004427343
    %v800 = vsel %vm799, %v797, %v794
    %v801 = vsub.f32 0.0, %v800
    %v802 = vsub.f32 %v762, %v773
    %v803 = vsel %vm788, %v801, %v802
    %v804 = vsub.f32 0.0, %v803
    %v805 = vsub.f32 0.0, %v787
    %v806 = vsel %vm28, %v804, %v805
    %v807 = vsel %vm27, 0.0, %v806
    %v808 = vmul.f32 %v70, 0.13333334
    %v809 = vmul.f32 %v91, 0.26666668
    %v810 = vadd.f32 %v808, %v809
    %v811 = vmul.f32 %v116, 0.13333334
    %v812 = vadd.f32 %v810, %v811
    %v813 = vmul.f32 %v429, 0.13333334
    %v814 = vadd.f32 %v812, %v813
    %v815 = vmul.f32 %v807, 0.06666667
    %v816 = vadd.f32 %v814, %v815
    %v817 = vmul.f32 %v447, 0.13333334
    %v818 = vadd.f32 %v816, %v817
    %v819 = vmul.f32 %v759, 0.13333334
    %v820 = vadd.f32 %v818, %v819
    %821 = vst [vmem:[#allocation5] sm:$0x1] %v820
    %822 = vst [vmem:[#allocation5 + $0x1] sm:$0x1] %v70
    %823 = vst [vmem:[#allocation5 + $0x2] sm:$0x1] %v91
    %824 = vst [vmem:[#allocation5 + $0x3] sm:$0x1] %v116
    %825 = vst [vmem:[#allocation5 + $0x4] sm:$0x1] %v429
    %826 = vst [vmem:[#allocation5 + $0x5] sm:$0x1] %v807
    %827 = vst [vmem:[#allocation5 + $0x6] sm:$0x1] %v447
    %828 = vst [vmem:[#allocation5 + $0x7] sm:$0x1] %v759
    // Predicated region
    $region10: #{tpu_custom_call.1} parent=1 // pred_check
      _
    $region11: #{tpu_custom_call.1} parent=1 // pred_check_branch
      %830 = sbr.rel (0) target = $region13
    $region12: #{tpu_custom_call.1} parent=1 // pred_region
      %s832 = ssub.s32 128, 128
      %833 = vsyncadd [#allocation4], %s832
      %s835 = sshll.u32 [#allocation5], 4
      %s836 = int_to_ptr.vmem [resolvable:$true] %s835
      %838 = dma.vmem_to_hbm [thread:$0]  %s836, 128, %s1, [#allocation4]
    $region13: #{tpu_custom_call.1} parent=1 // pred_fallthru
      _
    // Predicated region
    $region14: #{tpu_custom_call.1} parent=1 // pred_check
      _
    $region15: #{tpu_custom_call.1} parent=1 // pred_check_branch
      %840 = sbr.rel (0) target = $region17
    $region16: #{tpu_custom_call.1} parent=1 // pred_region
      %841 = dma.done [#allocation4], 128
    $region17: #{tpu_custom_call.1} parent=1 // pred_fallthru
      _
    %842 = vsyncpa [#allocation3], 1
    %843 = vsyncpa [#allocation4], 1

</llo_original>
